<compile_context>
chip_gen: v7x
topology: tpu7x:2x2x1
jax: 0.10.0
libtpu: 0.0.40
codegen_flags: <defaults>
</compile_context>

<pallas_src>
import jax
import jax.numpy as jnp
from jax.experimental import pallas as pl
from jax.experimental.pallas import tpu as pltpu


# -----------------------------------------------------------------------------
# Kernel 1: per-utterance precompute  enc_proj = encoder_outs @ V_w + V_b
# -----------------------------------------------------------------------------
def _enc_proj_kernel(enc_ref, vw_ref, vb_ref, out_ref):
    B, T, E = enc_ref.shape
    H = vw_ref.shape[1]
    # Leading-dim merge is a free sublane reshape (minor dim E unchanged):
    enc2d = enc_ref[...].reshape(B * T, E)                      # [B*T, E]  f32
    vw = vw_ref[...].astype(jnp.float32)                        # bf16 -> f32 in vregs
    proj = jnp.dot(enc2d, vw, preferred_element_type=jnp.float32)   # [B*T, H]
    out_ref[...] = (proj + vb_ref[...]).reshape(B, T, H)


def precompute_encoder_projection(encoder_outs, v_w, v_b):
    """V(encoder_outs) + b_V.  Decoder-independent: call once per utterance."""
    B, T, _ = encoder_outs.shape
    H = v_w.shape[1]
    vmem = pl.BlockSpec(memory_space=pltpu.MemorySpace.VMEM)
    return pl.pallas_call(
        _enc_proj_kernel,
        out_shape=jax.ShapeDtypeStruct((B, T, H), jnp.float32),
        in_specs=[vmem, vmem, vmem],
        out_specs=vmem,
    )(encoder_outs, v_w, v_b)


# -----------------------------------------------------------------------------
# Kernel 2: per-decoder-step attention
# -----------------------------------------------------------------------------
def _bahdanau_step_kernel(enc_ref, encp_ref, dec_ref, ww_ref, ws_ref, wb_ref,
                          ctx_ref, attn_ref):
    # enc_ref : [B, T, E] f32      encp_ref: [B, T, H] f32 (precomputed V-proj)
    # dec_ref : [B, D]    f32      ww_ref  : [D, H] bf16 (largest per-step DMA)
    # ws_ref  : [H, 1]    f32      wb_ref  : [1, 1] f32

    # W(decoder_state): [B, H] on the MXU; upcast bf16 weight in-register.
    ww = ww_ref[...].astype(jnp.float32)
    dec_proj = jnp.dot(dec_ref[...], ww, preferred_element_type=jnp.float32)

    # tanh(W(dec)[:, None, :] + V(enc))  -> [B, T, H]
    h = jnp.tanh(dec_proj[:, None, :] + encp_ref[...])

    # Score per (b, t): VPU multiply + lane reduce over H (MXU variant only pays
    # off at large T; see TODO at top of file).
    w_vec = ws_ref[...][:, 0]                                   # [H]
    erg = jnp.sum(h * w_vec, axis=-1) + wb_ref[...]             # [B, T]

    # Softmax over the time axis; reciprocal on the otherwise-idle EUP.
    m = jnp.max(erg, axis=1, keepdims=True)
    e = jnp.exp(erg - m)
    s = jnp.sum(e, axis=1, keepdims=True)
    attn = e * pl.reciprocal(s, approx=True)                    # [B, T]

    # attention context: sum_t enc[b, t, :] * attn[b, t]  -> [B, E]
    ctx = jnp.sum(enc_ref[...] * attn[:, :, None], axis=1)

    ctx_ref[...] = ctx.astype(ctx_ref.dtype)
    attn_ref[...] = attn.astype(attn_ref.dtype)


def bahdanau_attention_step(encoder_outs, enc_proj, decoder_state, params):
    """One attention step, reusing the precomputed encoder projection."""
    B, T, E = encoder_outs.shape
    dtype = encoder_outs.dtype
    vmem = pl.BlockSpec(memory_space=pltpu.MemorySpace.VMEM)
    return pl.pallas_call(
        _bahdanau_step_kernel,
        out_shape=(jax.ShapeDtypeStruct((B, E), dtype),
                   jax.ShapeDtypeStruct((B, T), dtype)),
        in_specs=[vmem] * 6,
        out_specs=(vmem, vmem),
        # Gridless: everything (<350 KiB) fits VMEM on every generation.
        # TODO(synk): at serving batch sizes add a "parallel" batch grid axis so
        # v7x's second TensorCore is used.
    )(encoder_outs, enc_proj, decoder_state,
      params['W_w'], params['w_w'], params['w_b'])


def bahdanau_attention(encoder_outs, decoder_state, params):
    """Full forward matching the PyTorch module.

    In an autoregressive decode loop, call `precompute_encoder_projection` once
    and `bahdanau_attention_step` every step; this helper does both for a single
    call so it is a drop-in for the module's forward().
    """
    enc_proj = precompute_encoder_projection(
        encoder_outs, params['V_w'], params['V_b'])
    return bahdanau_attention_step(encoder_outs, enc_proj, decoder_state, params)


# -----------------------------------------------------------------------------
# Pure-JAX reference & deterministic params
# -----------------------------------------------------------------------------
def reference(encoder_outs, decoder_state, params):
    """Pure-JAX reference mirroring the PyTorch forward (f32 math throughout)."""
    v_w = params['V_w'].astype(jnp.float32)
    w_w = params['W_w'].astype(jnp.float32)
    dec_proj = decoder_state @ w_w                                   # [B, H]
    enc_proj = jnp.einsum('bte,eh->bth', encoder_outs, v_w) + params['V_b']
    h = jnp.tanh(dec_proj[:, None, :] + enc_proj)
    erg = jnp.sum(h * params['w_w'][:, 0], axis=-1) + params['w_b'][0, 0]
    attn = jax.nn.softmax(erg, axis=1)
    ctx = jnp.sum(encoder_outs * attn[:, :, None], axis=1)
    return ctx, attn


def init_params(key, encoder_dim, decoder_dim, hidden_dim):
    """Torch-Linear-like uniform fan-in init.  Weights pre-transposed to [in, out];
    the two large matrices are stored in bfloat16 (DMA-bandwidth optimization)."""
    k1, k2, k3, k4, k5 = jax.random.split(key, 5)

    def u(k, shape, fan_in):
        bound = float(fan_in) ** -0.5
        return jax.random.uniform(k, shape, jnp.float32, -bound, bound)

    return {
        'V_w': u(k1, (encoder_dim, hidden_dim), encoder_dim).astype(jnp.bfloat16),
        'V_b': u(k2, (1, hidden_dim), encoder_dim),
        'W_w': u(k3, (decoder_dim, hidden_dim), decoder_dim).astype(jnp.bfloat16),
        'w_w': u(k4, (hidden_dim, 1), hidden_dim),
        'w_b': u(k5, (1, 1), hidden_dim),
    }


if __name__ == "__main__":
    B, T = 2, 8
    encoder_dim, decoder_dim, hidden_dim = 512, 1024, 128

    key = jax.random.PRNGKey(0)
    k_enc, k_dec, k_par = jax.random.split(key, 3)

    encoder_outs = jax.random.normal(k_enc, (B, T, encoder_dim), jnp.float32)
    decoder_state = jax.random.normal(k_dec, (B, decoder_dim), jnp.float32)
    params = init_params(k_par, encoder_dim, decoder_dim, hidden_dim)

    fwd = jax.jit(bahdanau_attention)
    ctx, attn = fwd(encoder_outs, decoder_state, params)
    jax.block_until_ready((ctx, attn))

    ctx_ref, attn_ref = reference(encoder_outs, decoder_state, params)

    assert ctx.shape == (B, encoder_dim) and attn.shape == (B, T)
    # Tolerances account for pl.reciprocal(approx=True) in the softmax denominator.
    assert jnp.allclose(ctx, ctx_ref, atol=2e-3, rtol=2e-3)
    assert jnp.allclose(attn, attn_ref, atol=2e-3, rtol=2e-3)
    assert jnp.allclose(jnp.sum(attn, axis=1), 1.0, atol=2e-3)

    print("KERNEL_OK")
</pallas_src>

<mosaic_0001>
module attributes {stable_mosaic.version = 11 : i64} {
  func.func @_bahdanau_step_kernel(%arg0: memref<2x8x512xf32, #tpu.memory_space<vmem>>, %arg1: memref<2x8x128xf32, #tpu.memory_space<vmem>>, %arg2: memref<2x1024xf32, #tpu.memory_space<vmem>>, %arg3: memref<1024x128xbf16, #tpu.memory_space<vmem>>, %arg4: memref<128x1xf32, #tpu.memory_space<vmem>>, %arg5: memref<1x1xf32, #tpu.memory_space<vmem>>, %arg6: memref<2x512xf32, #tpu.memory_space<vmem>>, %arg7: memref<2x8xf32, #tpu.memory_space<vmem>>) attributes {dimension_semantics = [], scalar_prefetch = 0 : i64, scratch_operands = 0 : i64, tpu.core_type = #tpu.core_type<tc>} {
    %c0 = arith.constant 0 : index
    %c0_0 = arith.constant 0 : index
    %0 = vector.load %arg3[%c0, %c0_0] : memref<1024x128xbf16, #tpu.memory_space<vmem>>, vector<1024x128xbf16>
    %1 = arith.extf %0 : vector<1024x128xbf16> to vector<1024x128xf32>
    %c0_1 = arith.constant 0 : index
    %c0_2 = arith.constant 0 : index
    %2 = vector.load %arg2[%c0_1, %c0_2] : memref<2x1024xf32, #tpu.memory_space<vmem>>, vector<2x1024xf32>
    %cst = arith.constant dense<0.000000e+00> : vector<2x128xf32>
    %3 = tpu.matmul %2, %1, %cst {dimension_numbers = #tpu.dot_dimension_numbers<[1], [0], [0], [1], [0, 0, 1, 1], [], []>} : vector<2x1024xf32>, vector<1024x128xf32>, vector<2x128xf32> -> vector<2x128xf32>
    %4 = vector.shape_cast %3 : vector<2x128xf32> to vector<2x1x128xf32>
    %c0_3 = arith.constant 0 : index
    %c0_4 = arith.constant 0 : index
    %c0_5 = arith.constant 0 : index
    %5 = vector.load %arg1[%c0_3, %c0_4, %c0_5] : memref<2x8x128xf32, #tpu.memory_space<vmem>>, vector<2x8x128xf32>
    %6 = vector.broadcast %4 : vector<2x1x128xf32> to vector<2x8x128xf32>
    %7 = arith.addf %6, %5 : vector<2x8x128xf32>
    %8 = math.tanh %7 : vector<2x8x128xf32>
    %c0_6 = arith.constant 0 : index
    %c0_7 = arith.constant 0 : index
    %9 = vector.load %arg4[%c0_6, %c0_7] : memref<128x1xf32, #tpu.memory_space<vmem>>, vector<128x1xf32>
    %10 = vector.shape_cast %9 : vector<128x1xf32> to vector<128xf32>
    %11 = vector.shape_cast %10 : vector<128xf32> to vector<1x1x128xf32>
    %12 = vector.broadcast %11 : vector<1x1x128xf32> to vector<2x8x128xf32>
    %13 = arith.mulf %8, %12 : vector<2x8x128xf32>
    %cst_8 = arith.constant dense<0.000000e+00> : vector<2x8xf32>
    %14 = vector.multi_reduction <add>, %13, %cst_8 [2] : vector<2x8x128xf32> to vector<2x8xf32>
    %c0_9 = arith.constant 0 : index
    %c0_10 = arith.constant 0 : index
    %15 = vector.load %arg5[%c0_9, %c0_10] : memref<1x1xf32, #tpu.memory_space<vmem>>, vector<1x1xf32>
    %16 = vector.broadcast %15 : vector<1x1xf32> to vector<2x8xf32>
    %17 = arith.addf %14, %16 : vector<2x8xf32>
    %cst_11 = arith.constant dense<0xFF800000> : vector<2xf32>
    %18 = vector.multi_reduction <maximumf>, %17, %cst_11 [1] : vector<2x8xf32> to vector<2xf32>
    %19 = vector.shape_cast %18 : vector<2xf32> to vector<2x1xf32>
    %20 = vector.broadcast %19 : vector<2x1xf32> to vector<2x8xf32>
    %21 = arith.subf %17, %20 : vector<2x8xf32>
    %22 = math.exp %21 : vector<2x8xf32>
    %cst_12 = arith.constant dense<0.000000e+00> : vector<2xf32>
    %23 = vector.multi_reduction <add>, %22, %cst_12 [1] : vector<2x8xf32> to vector<2xf32>
    %24 = vector.shape_cast %23 : vector<2xf32> to vector<2x1xf32>
    %25 = tpu.reciprocal %24 {approx = true} : vector<2x1xf32> -> vector<2x1xf32>
    %26 = vector.broadcast %25 : vector<2x1xf32> to vector<2x8xf32>
    %27 = arith.mulf %22, %26 : vector<2x8xf32>
    %c0_13 = arith.constant 0 : index
    %c0_14 = arith.constant 0 : index
    %c0_15 = arith.constant 0 : index
    %28 = vector.load %arg0[%c0_13, %c0_14, %c0_15] : memref<2x8x512xf32, #tpu.memory_space<vmem>>, vector<2x8x512xf32>
    %29 = vector.shape_cast %27 : vector<2x8xf32> to vector<2x8x1xf32>
    %30 = vector.broadcast %29 : vector<2x8x1xf32> to vector<2x8x512xf32>
    %31 = arith.mulf %28, %30 : vector<2x8x512xf32>
    %cst_16 = arith.constant dense<0.000000e+00> : vector<2x512xf32>
    %32 = vector.multi_reduction <add>, %31, %cst_16 [1] : vector<2x8x512xf32> to vector<2x512xf32>
    %c0_17 = arith.constant 0 : index
    %c0_18 = arith.constant 0 : index
    %33 = vector.load %arg6[%c0_17, %c0_18] : memref<2x512xf32, #tpu.memory_space<vmem>>, vector<2x512xf32>
    tpu.vector_store %arg6[%c0_17, %c0_18], %32 {strides = array<i32>} : memref<2x512xf32, #tpu.memory_space<vmem>>, vector<2x512xf32>,
    %c0_19 = arith.constant 0 : index
    %c0_20 = arith.constant 0 : index
    %34 = vector.load %arg7[%c0_19, %c0_20] : memref<2x8xf32, #tpu.memory_space<vmem>>, vector<2x8xf32>
    tpu.vector_store %arg7[%c0_19, %c0_20], %27 {strides = array<i32>} : memref<2x8xf32, #tpu.memory_space<vmem>>, vector<2x8xf32>,
    return
  }
}

module attributes {stable_mosaic.version = 11 : i64} {
  func.func @_enc_proj_kernel(%arg0: memref<2x8x512xf32, #tpu.memory_space<vmem>>, %arg1: memref<512x128xbf16, #tpu.memory_space<vmem>>, %arg2: memref<1x128xf32, #tpu.memory_space<vmem>>, %arg3: memref<2x8x128xf32, #tpu.memory_space<vmem>>) attributes {dimension_semantics = [], scalar_prefetch = 0 : i64, scratch_operands = 0 : i64, tpu.core_type = #tpu.core_type<tc>} {
    %c0 = arith.constant 0 : index
    %c0_0 = arith.constant 0 : index
    %c0_1 = arith.constant 0 : index
    %0 = vector.load %arg0[%c0, %c0_0, %c0_1] : memref<2x8x512xf32, #tpu.memory_space<vmem>>, vector<2x8x512xf32>
    %1 = vector.shape_cast %0 : vector<2x8x512xf32> to vector<16x512xf32>
    %c0_2 = arith.constant 0 : index
    %c0_3 = arith.constant 0 : index
    %2 = vector.load %arg1[%c0_2, %c0_3] : memref<512x128xbf16, #tpu.memory_space<vmem>>, vector<512x128xbf16>
    %3 = arith.extf %2 : vector<512x128xbf16> to vector<512x128xf32>
    %cst = arith.constant dense<0.000000e+00> : vector<16x128xf32>
    %4 = tpu.matmul %1, %3, %cst {dimension_numbers = #tpu.dot_dimension_numbers<[1], [0], [0], [1], [0, 0, 1, 1], [], []>} : vector<16x512xf32>, vector<512x128xf32>, vector<16x128xf32> -> vector<16x128xf32>
    %c0_4 = arith.constant 0 : index
    %c0_5 = arith.constant 0 : index
    %5 = vector.load %arg2[%c0_4, %c0_5] : memref<1x128xf32, #tpu.memory_space<vmem>>, vector<1x128xf32>
    %6 = vector.broadcast %5 : vector<1x128xf32> to vector<16x128xf32>
    %7 = arith.addf %4, %6 : vector<16x128xf32>
    %8 = vector.shape_cast %7 : vector<16x128xf32> to vector<2x8x128xf32>
    %c0_6 = arith.constant 0 : index
    %c0_7 = arith.constant 0 : index
    %c0_8 = arith.constant 0 : index
    %9 = vector.load %arg3[%c0_6, %c0_7, %c0_8] : memref<2x8x128xf32, #tpu.memory_space<vmem>>, vector<2x8x128xf32>
    tpu.vector_store %arg3[%c0_6, %c0_7, %c0_8], %8 {strides = array<i32>} : memref<2x8x128xf32, #tpu.memory_space<vmem>>, vector<2x8x128xf32>,
    return
  }
}

</mosaic_0001>

<llo_original>
// kernel: bahdanau_attention.2
$region0: #{bahdanau_attention.2}
  #allocation0 [shape = 'u32[]', space=smem, size = 0x4, offset = 0x4, fixed_abs, tag = 'smem constant byte address 0x4 - core index']
  #allocation1 [shape = 'u32[144,128]{1,0:T(1,128)}', space=vmem, size = 0x12000, scoped, tag = 'internal scratch']
  %s0 = inlined_call_operand.hbm [shape: f32[2,8,512], index: 0, kind: input, shape index: {}]
  %s1 = inlined_call_operand.hbm [shape: bf16[512,128], index: 1, kind: input, shape index: {}]
  %s2 = inlined_call_operand.vmem [shape: f32[1,128], index: 2, kind: input, shape index: {}]
  %s3 = inlined_call_operand.vmem [shape: f32[2,8,128], index: 3, kind: output, shape index: {}]
  %s4 = sld [smem:[#allocation0]]
  $region30: #{bahdanau_attention.2} parent=0
    _
  %s6 = ssub.s32 1, %s4
  %s7 = scalar_select 0, %s6, %s4
  $region1: #{bahdanau_attention.2} parent=0
    #allocation2 [shape = 'u8[32768]{0}', space=vmem, size = 0x8000, scoped, tag = 'input window, operand 0, single buffered']
    #allocation3 [shape = 's32[1]{0}', space=sflag, size = 0x4, scoped, tag = 'scoped memory for bahdanau_attention.2']
    #allocation4 [shape = 'u8[131072]{0}', space=vmem, size = 0x20000, scoped, tag = 'input window, operand 1, single buffered']
    #allocation5 [shape = 's32[1]{0}', space=sflag, size = 0x4, scoped, tag = 'scoped memory for bahdanau_attention.2']
    %8 = vsyncpa [#allocation3], 0
    %9 = vsyncpa [#allocation5], 0
    // Predicated region
    $region2: #{bahdanau_attention.2} parent=1 // pred_check
      _
    $region3: #{bahdanau_attention.2} parent=1 // pred_check_branch
      %11 = sbr.rel (0) target = $region5
    $region4: #{bahdanau_attention.2} parent=1 // pred_region
      %s13 = ssub.s32 1024, 1024
      %14 = vsyncadd [#allocation3], %s13
      %s15 = sshll.u32 [#allocation2], 4
      %s16 = int_to_ptr.vmem [resolvable:$true] %s15
      %21 = dma.hbm_to_vmem [thread:$0]  %s0, 1024, %s16, [#allocation3], 512, 512, 32
    $region5: #{bahdanau_attention.2} parent=1 // pred_fallthru
      _
    // Predicated region
    $region6: #{bahdanau_attention.2} parent=1 // pred_check
      _
    $region7: #{bahdanau_attention.2} parent=1 // pred_check_branch
      %23 = sbr.rel (0) target = $region9
    $region8: #{bahdanau_attention.2} parent=1 // pred_region
      %s25 = ssub.s32 4096, 4096
      %26 = vsyncadd [#allocation5], %s25
      %s27 = sshll.u32 [#allocation4], 4
      %s28 = int_to_ptr.vmem [resolvable:$true] %s27
      %33 = dma.hbm_to_vmem [thread:$0]  %s1, 4096, %s28, [#allocation5], 64, 64, 4
    $region9: #{bahdanau_attention.2} parent=1 // pred_fallthru
      _
    // Predicated region
    $region10: #{bahdanau_attention.2} parent=1 // pred_check
      _
    $region11: #{bahdanau_attention.2} parent=1 // pred_check_branch
      %35 = sbr.rel (0) target = $region13
    $region12: #{bahdanau_attention.2} parent=1 // pred_region
      _
    $region13: #{bahdanau_attention.2} parent=1 // pred_fallthru
      _
    // Predicated region
    $region14: #{bahdanau_attention.2} parent=1 // pred_check
      _
    $region15: #{bahdanau_attention.2} parent=1 // pred_check_branch
      %37 = sbr.rel (0) target = $region17
    $region16: #{bahdanau_attention.2} parent=1 // pred_region
      %38 = dma.done [#allocation3], 1024
    $region17: #{bahdanau_attention.2} parent=1 // pred_fallthru
      _
    // Predicated region
    $region18: #{bahdanau_attention.2} parent=1 // pred_check
      _
    $region19: #{bahdanau_attention.2} parent=1 // pred_check_branch
      %40 = sbr.rel (0) target = $region21
    $region20: #{bahdanau_attention.2} parent=1 // pred_region
      %41 = dma.done [#allocation5], 4096
    $region21: #{bahdanau_attention.2} parent=1 // pred_fallthru
      _
    %v42 = vld [vmem:[#allocation2] sm:$0xff]
    %v43 = vld [vmem:[#allocation2 + $0x8] sm:$0xff]
    %v44 = vld [vmem:[#allocation2 + $0x10] sm:$0xff]
    %v45 = vld [vmem:[#allocation2 + $0x18] sm:$0xff]
    %v46 = vld [vmem:[#allocation2 + $0x20] sm:$0xff]
    %v47 = vld [vmem:[#allocation2 + $0x28] sm:$0xff]
    %v48 = vld [vmem:[#allocation2 + $0x30] sm:$0xff]
    %v49 = vld [vmem:[#allocation2 + $0x38] sm:$0xff]
    %v50 = vld [vmem:[#allocation4] sm:$0xf]
    %v51 = vld [vmem:[#allocation4 + $0x4] sm:$0xf]
    %v52 = vld [vmem:[#allocation4 + $0x8] sm:$0xf]
    %v53 = vld [vmem:[#allocation4 + $0xc] sm:$0xf]
    %v54 = vld [vmem:[#allocation4 + $0x10] sm:$0xf]
    %v55 = vld [vmem:[#allocation4 + $0x14] sm:$0xf]
    %v56 = vld [vmem:[#allocation4 + $0x18] sm:$0xf]
    %v57 = vld [vmem:[#allocation4 + $0x1c] sm:$0xf]
    %v58 = vld [vmem:[#allocation4 + $0x20] sm:$0xf]
    %v59 = vld [vmem:[#allocation4 + $0x24] sm:$0xf]
    %v60 = vld [vmem:[#allocation4 + $0x28] sm:$0xf]
    %v61 = vld [vmem:[#allocation4 + $0x2c] sm:$0xf]
    %v62 = vld [vmem:[#allocation4 + $0x30] sm:$0xf]
    %v63 = vld [vmem:[#allocation4 + $0x34] sm:$0xf]
    %v64 = vld [vmem:[#allocation4 + $0x38] sm:$0xf]
    %v65 = vld [vmem:[#allocation4 + $0x3c] sm:$0xf]
    %v66 = vld [vmem:[#allocation4 + $0x40] sm:$0xf]
    %v67 = vld [vmem:[#allocation4 + $0x44] sm:$0xf]
    %v68 = vld [vmem:[#allocation4 + $0x48] sm:$0xf]
    %v69 = vld [vmem:[#allocation4 + $0x4c] sm:$0xf]
    %v70 = vld [vmem:[#allocation4 + $0x50] sm:$0xf]
    %v71 = vld [vmem:[#allocation4 + $0x54] sm:$0xf]
    %v72 = vld [vmem:[#allocation4 + $0x58] sm:$0xf]
    %v73 = vld [vmem:[#allocation4 + $0x5c] sm:$0xf]
    %v74 = vld [vmem:[#allocation4 + $0x60] sm:$0xf]
    %v75 = vld [vmem:[#allocation4 + $0x64] sm:$0xf]
    %v76 = vld [vmem:[#allocation4 + $0x68] sm:$0xf]
    %v77 = vld [vmem:[#allocation4 + $0x6c] sm:$0xf]
    %v78 = vld [vmem:[#allocation4 + $0x70] sm:$0xf]
    %v79 = vld [vmem:[#allocation4 + $0x74] sm:$0xf]
    %v80 = vld [vmem:[#allocation4 + $0x78] sm:$0xf]
    %v81 = vld [vmem:[#allocation4 + $0x7c] sm:$0xf]
    %v82 = vld [vmem:[#allocation4 + $0x80] sm:$0xf]
    %v83 = vld [vmem:[#allocation4 + $0x84] sm:$0xf]
    %v84 = vld [vmem:[#allocation4 + $0x88] sm:$0xf]
    %v85 = vld [vmem:[#allocation4 + $0x8c] sm:$0xf]
    %v86 = vld [vmem:[#allocation4 + $0x90] sm:$0xf]
    %v87 = vld [vmem:[#allocation4 + $0x94] sm:$0xf]
    %v88 = vld [vmem:[#allocation4 + $0x98] sm:$0xf]
    %v89 = vld [vmem:[#allocation4 + $0x9c] sm:$0xf]
    %v90 = vld [vmem:[#allocation4 + $0xa0] sm:$0xf]
    %v91 = vld [vmem:[#allocation4 + $0xa4] sm:$0xf]
    %v92 = vld [vmem:[#allocation4 + $0xa8] sm:$0xf]
    %v93 = vld [vmem:[#allocation4 + $0xac] sm:$0xf]
    %v94 = vld [vmem:[#allocation4 + $0xb0] sm:$0xf]
    %v95 = vld [vmem:[#allocation4 + $0xb4] sm:$0xf]
    %v96 = vld [vmem:[#allocation4 + $0xb8] sm:$0xf]
    %v97 = vld [vmem:[#allocation4 + $0xbc] sm:$0xf]
    %v98 = vld [vmem:[#allocation4 + $0xc0] sm:$0xf]
    %v99 = vld [vmem:[#allocation4 + $0xc4] sm:$0xf]
    %v100 = vld [vmem:[#allocation4 + $0xc8] sm:$0xf]
    %v101 = vld [vmem:[#allocation4 + $0xcc] sm:$0xf]
    %v102 = vld [vmem:[#allocation4 + $0xd0] sm:$0xf]
    %v103 = vld [vmem:[#allocation4 + $0xd4] sm:$0xf]
    %v104 = vld [vmem:[#allocation4 + $0xd8] sm:$0xf]
    %v105 = vld [vmem:[#allocation4 + $0xdc] sm:$0xf]
    %v106 = vld [vmem:[#allocation4 + $0xe0] sm:$0xf]
    %v107 = vld [vmem:[#allocation4 + $0xe4] sm:$0xf]
    %v108 = vld [vmem:[#allocation4 + $0xe8] sm:$0xf]
    %v109 = vld [vmem:[#allocation4 + $0xec] sm:$0xf]
    %v110 = vld [vmem:[#allocation4 + $0xf0] sm:$0xf]
    %v111 = vld [vmem:[#allocation4 + $0xf4] sm:$0xf]
    %v112 = vld [vmem:[#allocation4 + $0xf8] sm:$0xf]
    %v113 = vld [vmem:[#allocation4 + $0xfc] sm:$0xf]
    %v114 = vunpack.c.l.bf16 %v50
    %v115 = vunpack.c.l.bf16 %v51
    %v116 = vunpack.c.l.bf16 %v52
    %v117 = vunpack.c.l.bf16 %v53
    %v118 = vunpack.c.l.bf16 %v54
    %v119 = vunpack.c.l.bf16 %v55
    %v120 = vunpack.c.l.bf16 %v56
    %v121 = vunpack.c.l.bf16 %v57
    %v122 = vunpack.c.l.bf16 %v58
    %v123 = vunpack.c.l.bf16 %v59
    %v124 = vunpack.c.l.bf16 %v60
    %v125 = vunpack.c.l.bf16 %v61
    %v126 = vunpack.c.l.bf16 %v62
    %v127 = vunpack.c.l.bf16 %v63
    %v128 = vunpack.c.l.bf16 %v64
    %v129 = vunpack.c.l.bf16 %v65
    %v130 = vunpack.c.l.bf16 %v66
    %v131 = vunpack.c.l.bf16 %v67
    %v132 = vunpack.c.l.bf16 %v68
    %v133 = vunpack.c.l.bf16 %v69
    %v134 = vunpack.c.l.bf16 %v70
    %v135 = vunpack.c.l.bf16 %v71
    %v136 = vunpack.c.l.bf16 %v72
    %v137 = vunpack.c.l.bf16 %v73
    %v138 = vunpack.c.l.bf16 %v74
    %v139 = vunpack.c.l.bf16 %v75
    %v140 = vunpack.c.l.bf16 %v76
    %v141 = vunpack.c.l.bf16 %v77
    %v142 = vunpack.c.l.bf16 %v78
    %v143 = vunpack.c.l.bf16 %v79
    %v144 = vunpack.c.l.bf16 %v80
    %v145 = vunpack.c.l.bf16 %v81
    %v146 = vunpack.c.l.bf16 %v82
    %v147 = vunpack.c.l.bf16 %v83
    %v148 = vunpack.c.l.bf16 %v84
    %v149 = vunpack.c.l.bf16 %v85
    %v150 = vunpack.c.l.bf16 %v86
    %v151 = vunpack.c.l.bf16 %v87
    %v152 = vunpack.c.l.bf16 %v88
    %v153 = vunpack.c.l.bf16 %v89
    %v154 = vunpack.c.l.bf16 %v90
    %v155 = vunpack.c.l.bf16 %v91
    %v156 = vunpack.c.l.bf16 %v92
    %v157 = vunpack.c.l.bf16 %v93
    %v158 = vunpack.c.l.bf16 %v94
    %v159 = vunpack.c.l.bf16 %v95
    %v160 = vunpack.c.l.bf16 %v96
    %v161 = vunpack.c.l.bf16 %v97
    %v162 = vunpack.c.l.bf16 %v98
    %v163 = vunpack.c.l.bf16 %v99
    %v164 = vunpack.c.l.bf16 %v100
    %v165 = vunpack.c.l.bf16 %v101
    %v166 = vunpack.c.l.bf16 %v102
    %v167 = vunpack.c.l.bf16 %v103
    %v168 = vunpack.c.l.bf16 %v104
    %v169 = vunpack.c.l.bf16 %v105
    %v170 = vunpack.c.l.bf16 %v106
    %v171 = vunpack.c.l.bf16 %v107
    %v172 = vunpack.c.l.bf16 %v108
    %v173 = vunpack.c.l.bf16 %v109
    %v174 = vunpack.c.l.bf16 %v110
    %v175 = vunpack.c.l.bf16 %v111
    %v176 = vunpack.c.l.bf16 %v112
    %v177 = vunpack.c.l.bf16 %v113
    %v178 = vld [vmem:[%s2] sm:$0x1]
    %v180 = vlaneseq
    %v181 = vshrl.u32 %v180, 7
    %v182 = vsub.s32 0, %v181
    %v183 = vrot.slane %v178, %v182
    %185 = vmatprep.subr.mxu0 0.0
    %186 = vmatpush1.msra.mxu0 %v114
    %187 = vmatprep.subr.mxu0 0.0
    %188 = vmatpush1.msra.mxu0 %v115
    %189 = vmatprep.subr.mxu0 0.0
    %190 = vmatpush1.msra.mxu0 %v116
    %191 = vmatprep.subr.mxu0 0.0
    %192 = vmatpush1.msra.mxu0 %v117
    %193 = vmatprep.subr.mxu0 0.0
    %194 = vmatpush1.msra.mxu0 %v118
    %195 = vmatprep.subr.mxu0 0.0
    %196 = vmatpush1.msra.mxu0 %v119
    %197 = vmatprep.subr.mxu0 0.0
    %198 = vmatpush1.msra.mxu0 %v120
    %199 = vmatprep.subr.mxu0 0.0
    %200 = vmatpush1.msra.mxu0 %v121
    %201 = vmatprep.subr.mxu0 0.0
    %202 = vmatpush1.msra.mxu0 %v122
    %203 = vmatprep.subr.mxu0 0.0
    %204 = vmatpush1.msra.mxu0 %v123
    %205 = vmatprep.subr.mxu0 0.0
    %206 = vmatpush1.msra.mxu0 %v124
    %207 = vmatprep.subr.mxu0 0.0
    %208 = vmatpush1.msra.mxu0 %v125
    %209 = vmatprep.subr.mxu0 0.0
    %210 = vmatpush1.msra.mxu0 %v126
    %211 = vmatprep.subr.mxu0 0.0
    %212 = vmatpush1.msra.mxu0 %v127
    %213 = vmatprep.subr.mxu0 0.0
    %214 = vmatpush1.msra.mxu0 %v128
    %215 = vmatprep.subr.mxu0 0.0
    %216 = vmatpush1.msra.mxu0 %v129
    %217 = vmatprep.subr.mxu0 0.0
    %218 = vmatpush1.msra.mxu0 %v130
    %219 = vmatprep.subr.mxu0 0.0
    %220 = vmatpush1.msra.mxu0 %v131
    %221 = vmatprep.subr.mxu0 0.0
    %222 = vmatpush1.msra.mxu0 %v132
    %223 = vmatprep.subr.mxu0 0.0
    %224 = vmatpush1.msra.mxu0 %v133
    %225 = vmatprep.subr.mxu0 0.0
    %226 = vmatpush1.msra.mxu0 %v134
    %227 = vmatprep.subr.mxu0 0.0
    %228 = vmatpush1.msra.mxu0 %v135
    %229 = vmatprep.subr.mxu0 0.0
    %230 = vmatpush1.msra.mxu0 %v136
    %231 = vmatprep.subr.mxu0 0.0
    %232 = vmatpush1.msra.mxu0 %v137
    %233 = vmatprep.subr.mxu0 0.0
    %234 = vmatpush1.msra.mxu0 %v138
    %235 = vmatprep.subr.mxu0 0.0
    %236 = vmatpush1.msra.mxu0 %v139
    %237 = vmatprep.subr.mxu0 0.0
    %238 = vmatpush1.msra.mxu0 %v140
    %239 = vmatprep.subr.mxu0 0.0
    %240 = vmatpush1.msra.mxu0 %v141
    %241 = vmatprep.subr.mxu0 0.0
    %242 = vmatpush1.msra.mxu0 %v142
    %243 = vmatprep.subr.mxu0 0.0
    %244 = vmatpush1.msra.mxu0 %v143
    %245 = vmatprep.subr.mxu0 0.0
    %246 = vmatpush1.msra.mxu0 %v144
    %247 = vmatprep.subr.mxu0 0.0
    %248 = vmatpush1.msra.mxu0 %v145
    %249 = vmatprep.mubr.f32.mxu0 %v43
    %250 = vmatmul.mubr.f32.gmra.mrb[0].mxu0 %v42
    %v251 = vpop.f32.mrb[0].mxu0
    %v252 = vadd.f32 %v183, %v251
    %v253 = vpop.f32.mrb[0].mxu0
    %254 = vmatprep.mubr.f32.mxu0 %v47
    %255 = vmatmul.mubr.f32.gmra.mrb[0].mxu0 %v46
    %v256 = vpop.f32.mrb[0].mxu0
    %v257 = vadd.f32 %v183, %v256
    %v258 = vpop.f32.mrb[0].mxu0
    %259 = vdwg.mxu0
    %260 = vmatprep.subr.mxu0 0.0
    %261 = vmatpush1.msra.mxu0 %v146
    %262 = vmatprep.subr.mxu0 0.0
    %263 = vmatpush1.msra.mxu0 %v147
    %264 = vmatprep.subr.mxu0 0.0
    %265 = vmatpush1.msra.mxu0 %v148
    %266 = vmatprep.subr.mxu0 0.0
    %267 = vmatpush1.msra.mxu0 %v149
    %268 = vmatprep.subr.mxu0 0.0
    %269 = vmatpush1.msra.mxu0 %v150
    %270 = vmatprep.subr.mxu0 0.0
    %271 = vmatpush1.msra.mxu0 %v151
    %272 = vmatprep.subr.mxu0 0.0
    %273 = vmatpush1.msra.mxu0 %v152
    %274 = vmatprep.subr.mxu0 0.0
    %275 = vmatpush1.msra.mxu0 %v153
    %276 = vmatprep.subr.mxu0 0.0
    %277 = vmatpush1.msra.mxu0 %v154
    %278 = vmatprep.subr.mxu0 0.0
    %279 = vmatpush1.msra.mxu0 %v155
    %280 = vmatprep.subr.mxu0 0.0
    %281 = vmatpush1.msra.mxu0 %v156
    %282 = vmatprep.subr.mxu0 0.0
    %283 = vmatpush1.msra.mxu0 %v157
    %284 = vmatprep.subr.mxu0 0.0
    %285 = vmatpush1.msra.mxu0 %v158
    %286 = vmatprep.subr.mxu0 0.0
    %287 = vmatpush1.msra.mxu0 %v159
    %288 = vmatprep.subr.mxu0 0.0
    %289 = vmatpush1.msra.mxu0 %v160
    %290 = vmatprep.subr.mxu0 0.0
    %291 = vmatpush1.msra.mxu0 %v161
    %292 = vmatprep.subr.mxu0 0.0
    %293 = vmatpush1.msra.mxu0 %v162
    %294 = vmatprep.subr.mxu0 0.0
    %295 = vmatpush1.msra.mxu0 %v163
    %296 = vmatprep.subr.mxu0 0.0
    %297 = vmatpush1.msra.mxu0 %v164
    %298 = vmatprep.subr.mxu0 0.0
    %299 = vmatpush1.msra.mxu0 %v165
    %300 = vmatprep.subr.mxu0 0.0
    %301 = vmatpush1.msra.mxu0 %v166
    %302 = vmatprep.subr.mxu0 0.0
    %303 = vmatpush1.msra.mxu0 %v167
    %304 = vmatprep.subr.mxu0 0.0
    %305 = vmatpush1.msra.mxu0 %v168
    %306 = vmatprep.subr.mxu0 0.0
    %307 = vmatpush1.msra.mxu0 %v169
    %308 = vmatprep.subr.mxu0 0.0
    %309 = vmatpush1.msra.mxu0 %v170
    %310 = vmatprep.subr.mxu0 0.0
    %311 = vmatpush1.msra.mxu0 %v171
    %312 = vmatprep.subr.mxu0 0.0
    %313 = vmatpush1.msra.mxu0 %v172
    %314 = vmatprep.subr.mxu0 0.0
    %315 = vmatpush1.msra.mxu0 %v173
    %316 = vmatprep.subr.mxu0 0.0
    %317 = vmatpush1.msra.mxu0 %v174
    %318 = vmatprep.subr.mxu0 0.0
    %319 = vmatpush1.msra.mxu0 %v175
    %320 = vmatprep.subr.mxu0 0.0
    %321 = vmatpush1.msra.mxu0 %v176
    %322 = vmatprep.subr.mxu0 0.0
    %323 = vmatpush1.msra.mxu0 %v177
    %324 = vmatprep.mubr.f32.mxu0 %v45
    %325 = vmatmul.mubr.f32.gmra.mrb[0].mxu0 %v44
    %v326 = vpop.f32.mrb[0].mxu0
    %v327 = vadd.f32 %v252, %v326
    %v328 = vpop.f32.mrb[0].mxu0
    %329 = vmatprep.mubr.f32.mxu0 %v49
    %330 = vmatmul.mubr.f32.gmra.mrb[0].mxu0 %v48
    %v331 = vpop.f32.mrb[0].mxu0
    %v332 = vadd.f32 %v257, %v331
    %v333 = vpop.f32.mrb[0].mxu0
    %334 = vdwg.mxu0
    %335 = vst [vmem:[%s3] sm:$0xff] %v327
    %336 = vst [vmem:[%s3 + $0x8] sm:$0xff] %v332
    // Predicated region
    $region22: #{bahdanau_attention.2} parent=1 // pred_check
      _
    $region23: #{bahdanau_attention.2} parent=1 // pred_check_branch
      %338 = sbr.rel (0) target = $region25
    $region24: #{bahdanau_attention.2} parent=1 // pred_region
      _
    $region25: #{bahdanau_attention.2} parent=1 // pred_fallthru
      _
    // Predicated region
    $region26: #{bahdanau_attention.2} parent=1 // pred_check
      _
    $region27: #{bahdanau_attention.2} parent=1 // pred_check_branch
      %340 = sbr.rel (0) target = $region29
    $region28: #{bahdanau_attention.2} parent=1 // pred_region
      _
    $region29: #{bahdanau_attention.2} parent=1 // pred_fallthru
      _
    %341 = vsyncpa [#allocation3], 1
    %342 = vsyncpa [#allocation5], 1

// kernel: bahdanau_attention.3
$region0: #{bahdanau_attention.3}
  #allocation0 [shape = 'u32[]', space=smem, size = 0x4, offset = 0x4, fixed_abs, tag = 'smem constant byte address 0x4 - core index']
  #allocation1 [shape = 'u32[144,128]{1,0:T(1,128)}', space=vmem, size = 0x12000, scoped, tag = 'internal scratch']
  #allocation2 [shape = 'f32[1,1]{1,0:T(1,128)S(1)}', space=vmem, size = 0x200, scoped, tag = 'scoped memory for bahdanau_attention.3']
  %s0 = inlined_call_operand.vmem [shape: f32[2,8,512], index: 0, kind: input, shape index: {}]
  %s1 = inlined_call_operand.vmem [shape: f32[2,8,128], index: 1, kind: input, shape index: {}]
  %s2 = inlined_call_operand.vmem [shape: f32[2,1024], index: 2, kind: input, shape index: {}]
  %s3 = inlined_call_operand.hbm [shape: bf16[1024,128], index: 3, kind: input, shape index: {}]
  %s4 = inlined_call_operand.vmem [shape: f32[128,1], index: 4, kind: input, shape index: {}]
  %s5 = inlined_call_operand.<no memory space> [shape: f32[1,1], index: 5, kind: input, shape index: {}]
  %s6 = inlined_call_operand.hbm [shape: f32[2,512], index: 6, kind: output, shape index: {0}]
  %s7 = inlined_call_operand.hbm [shape: f32[2,8], index: 7, kind: output, shape index: {1}]
  %8 = xla_tuple %s6, %s7
  %s9 = sld [smem:[#allocation0]]
  $region46: #{bahdanau_attention.3} parent=0
    _
  %s11 = ssub.s32 1, %s9
  %s12 = scalar_select 0, %s11, %s9
  %v13 = vstv %s5
  %14 = vst [vmem:[#allocation2] sm:$0x1] %v13
  $region1: #{bahdanau_attention.3} parent=0
    #allocation3 [shape = 'u8[262144]{0}', space=vmem, size = 0x40000, scoped, tag = 'input window, operand 3, single buffered']
    #allocation4 [shape = 's32[1]{0}', space=sflag, size = 0x4, scoped, tag = 'scoped memory for bahdanau_attention.3']
    #allocation5 [shape = 's32[1]{0}', space=sflag, size = 0x4, scoped, tag = 'scoped memory for bahdanau_attention.3']
    #allocation6 [shape = 'u8[4096]{0}', space=vmem, size = 0x1000, scoped, tag = 'output window, operand 0, single buffered']
    #allocation7 [shape = 'u8[1024]{0}', space=vmem, size = 0x400, scoped, tag = 'output window, operand 1, single buffered']
    #allocation8 [shape = 's32[1]{0}', space=sflag, size = 0x4, scoped, tag = 'scoped memory for bahdanau_attention.3']
    %15 = vsyncpa [#allocation4], 0
    %16 = vsyncpa [#allocation5], 0
    %17 = vsyncpa [#allocation8], 0
    // Predicated region
    $region2: #{bahdanau_attention.3} parent=1 // pred_check
      _
    $region3: #{bahdanau_attention.3} parent=1 // pred_check_branch
      %19 = sbr.rel (0) target = $region5
    $region4: #{bahdanau_attention.3} parent=1 // pred_region
      _
    $region5: #{bahdanau_attention.3} parent=1 // pred_fallthru
      _
    // Predicated region
    $region6: #{bahdanau_attention.3} parent=1 // pred_check
      _
    $region7: #{bahdanau_attention.3} parent=1 // pred_check_branch
      %21 = sbr.rel (0) target = $region9
    $region8: #{bahdanau_attention.3} parent=1 // pred_region
      _
    $region9: #{bahdanau_attention.3} parent=1 // pred_fallthru
      _
    // Predicated region
    $region10: #{bahdanau_attention.3} parent=1 // pred_check
      _
    $region11: #{bahdanau_attention.3} parent=1 // pred_check_branch
      %23 = sbr.rel (0) target = $region13
    $region12: #{bahdanau_attention.3} parent=1 // pred_region
      _
    $region13: #{bahdanau_attention.3} parent=1 // pred_fallthru
      _
    // Predicated region
    $region14: #{bahdanau_attention.3} parent=1 // pred_check
      _
    $region15: #{bahdanau_attention.3} parent=1 // pred_check_branch
      %25 = sbr.rel (0) target = $region17
    $region16: #{bahdanau_attention.3} parent=1 // pred_region
      %s27 = ssub.s32 8192, 8192
      %28 = vsyncadd [#allocation4], %s27
      %s29 = sshll.u32 [#allocation3], 4
      %s30 = int_to_ptr.vmem [resolvable:$true] %s29
      %35 = dma.hbm_to_vmem [thread:$0]  %s3, 8192, %s30, [#allocation4], 64, 64, 4
    $region17: #{bahdanau_attention.3} parent=1 // pred_fallthru
      _
    // Predicated region
    $region18: #{bahdanau_attention.3} parent=1 // pred_check
      _
    $region19: #{bahdanau_attention.3} parent=1 // pred_check_branch
      %37 = sbr.rel (0) target = $region21
    $region20: #{bahdanau_attention.3} parent=1 // pred_region
      _
    $region21: #{bahdanau_attention.3} parent=1 // pred_fallthru
      _
    // Predicated region
    $region22: #{bahdanau_attention.3} parent=1 // pred_check
      _
    $region23: #{bahdanau_attention.3} parent=1 // pred_check_branch
      %39 = sbr.rel (0) target = $region25
    $region24: #{bahdanau_attention.3} parent=1 // pred_region
      _
    $region25: #{bahdanau_attention.3} parent=1 // pred_fallthru
      _
    // Predicated region
    $region26: #{bahdanau_attention.3} parent=1 // pred_check
      _
    $region27: #{bahdanau_attention.3} parent=1 // pred_check_branch
      %41 = sbr.rel (0) target = $region29
    $region28: #{bahdanau_attention.3} parent=1 // pred_region
      %42 = dma.done [#allocation4], 8192
    $region29: #{bahdanau_attention.3} parent=1 // pred_fallthru
      _
    %v43 = vld [vmem:[#allocation3] sm:$0xf]
    %v44 = vld [vmem:[#allocation3 + $0x4] sm:$0xf]
    %v45 = vld [vmem:[#allocation3 + $0x8] sm:$0xf]
    %v46 = vld [vmem:[#allocation3 + $0xc] sm:$0xf]
    %v47 = vld [vmem:[#allocation3 + $0x10] sm:$0xf]
    %v48 = vld [vmem:[#allocation3 + $0x14] sm:$0xf]
    %v49 = vld [vmem:[#allocation3 + $0x18] sm:$0xf]
    %v50 = vld [vmem:[#allocation3 + $0x1c] sm:$0xf]
    %v51 = vld [vmem:[#allocation3 + $0x20] sm:$0xf]
    %v52 = vld [vmem:[#allocation3 + $0x24] sm:$0xf]
    %v53 = vld [vmem:[#allocation3 + $0x28] sm:$0xf]
    %v54 = vld [vmem:[#allocation3 + $0x2c] sm:$0xf]
    %v55 = vld [vmem:[#allocation3 + $0x30] sm:$0xf]
    %v56 = vld [vmem:[#allocation3 + $0x34] sm:$0xf]
    %v57 = vld [vmem:[#allocation3 + $0x38] sm:$0xf]
    %v58 = vld [vmem:[#allocation3 + $0x3c] sm:$0xf]
    %v59 = vld [vmem:[#allocation3 + $0x40] sm:$0xf]
    %v60 = vld [vmem:[#allocation3 + $0x44] sm:$0xf]
    %v61 = vld [vmem:[#allocation3 + $0x48] sm:$0xf]
    %v62 = vld [vmem:[#allocation3 + $0x4c] sm:$0xf]
    %v63 = vld [vmem:[#allocation3 + $0x50] sm:$0xf]
    %v64 = vld [vmem:[#allocation3 + $0x54] sm:$0xf]
    %v65 = vld [vmem:[#allocation3 + $0x58] sm:$0xf]
    %v66 = vld [vmem:[#allocation3 + $0x5c] sm:$0xf]
    %v67 = vld [vmem:[#allocation3 + $0x60] sm:$0xf]
    %v68 = vld [vmem:[#allocation3 + $0x64] sm:$0xf]
    %v69 = vld [vmem:[#allocation3 + $0x68] sm:$0xf]
    %v70 = vld [vmem:[#allocation3 + $0x6c] sm:$0xf]
    %v71 = vld [vmem:[#allocation3 + $0x70] sm:$0xf]
    %v72 = vld [vmem:[#allocation3 + $0x74] sm:$0xf]
    %v73 = vld [vmem:[#allocation3 + $0x78] sm:$0xf]
    %v74 = vld [vmem:[#allocation3 + $0x7c] sm:$0xf]
    %v75 = vld [vmem:[#allocation3 + $0x80] sm:$0xf]
    %v76 = vld [vmem:[#allocation3 + $0x84] sm:$0xf]
    %v77 = vld [vmem:[#allocation3 + $0x88] sm:$0xf]
    %v78 = vld [vmem:[#allocation3 + $0x8c] sm:$0xf]
    %v79 = vld [vmem:[#allocation3 + $0x90] sm:$0xf]
    %v80 = vld [vmem:[#allocation3 + $0x94] sm:$0xf]
    %v81 = vld [vmem:[#allocation3 + $0x98] sm:$0xf]
    %v82 = vld [vmem:[#allocation3 + $0x9c] sm:$0xf]
    %v83 = vld [vmem:[#allocation3 + $0xa0] sm:$0xf]
    %v84 = vld [vmem:[#allocation3 + $0xa4] sm:$0xf]
    %v85 = vld [vmem:[#allocation3 + $0xa8] sm:$0xf]
    %v86 = vld [vmem:[#allocation3 + $0xac] sm:$0xf]
    %v87 = vld [vmem:[#allocation3 + $0xb0] sm:$0xf]
    %v88 = vld [vmem:[#allocation3 + $0xb4] sm:$0xf]
    %v89 = vld [vmem:[#allocation3 + $0xb8] sm:$0xf]
    %v90 = vld [vmem:[#allocation3 + $0xbc] sm:$0xf]
    %v91 = vld [vmem:[#allocation3 + $0xc0] sm:$0xf]
    %v92 = vld [vmem:[#allocation3 + $0xc4] sm:$0xf]
    %v93 = vld [vmem:[#allocation3 + $0xc8] sm:$0xf]
    %v94 = vld [vmem:[#allocation3 + $0xcc] sm:$0xf]
    %v95 = vld [vmem:[#allocation3 + $0xd0] sm:$0xf]
    %v96 = vld [vmem:[#allocation3 + $0xd4] sm:$0xf]
    %v97 = vld [vmem:[#allocation3 + $0xd8] sm:$0xf]
    %v98 = vld [vmem:[#allocation3 + $0xdc] sm:$0xf]
    %v99 = vld [vmem:[#allocation3 + $0xe0] sm:$0xf]
    %v100 = vld [vmem:[#allocation3 + $0xe4] sm:$0xf]
    %v101 = vld [vmem:[#allocation3 + $0xe8] sm:$0xf]
    %v102 = vld [vmem:[#allocation3 + $0xec] sm:$0xf]
    %v103 = vld [vmem:[#allocation3 + $0xf0] sm:$0xf]
    %v104 = vld [vmem:[#allocation3 + $0xf4] sm:$0xf]
    %v105 = vld [vmem:[#allocation3 + $0xf8] sm:$0xf]
    %v106 = vld [vmem:[#allocation3 + $0xfc] sm:$0xf]
    %v107 = vld [vmem:[#allocation3 + $0x100] sm:$0xf]
    %v108 = vld [vmem:[#allocation3 + $0x104] sm:$0xf]
    %v109 = vld [vmem:[#allocation3 + $0x108] sm:$0xf]
    %v110 = vld [vmem:[#allocation3 + $0x10c] sm:$0xf]
    %v111 = vld [vmem:[#allocation3 + $0x110] sm:$0xf]
    %v112 = vld [vmem:[#allocation3 + $0x114] sm:$0xf]
    %v113 = vld [vmem:[#allocation3 + $0x118] sm:$0xf]
    %v114 = vld [vmem:[#allocation3 + $0x11c] sm:$0xf]
    %v115 = vld [vmem:[#allocation3 + $0x120] sm:$0xf]
    %v116 = vld [vmem:[#allocation3 + $0x124] sm:$0xf]
    %v117 = vld [vmem:[#allocation3 + $0x128] sm:$0xf]
    %v118 = vld [vmem:[#allocation3 + $0x12c] sm:$0xf]
    %v119 = vld [vmem:[#allocation3 + $0x130] sm:$0xf]
    %v120 = vld [vmem:[#allocation3 + $0x134] sm:$0xf]
    %v121 = vld [vmem:[#allocation3 + $0x138] sm:$0xf]
    %v122 = vld [vmem:[#allocation3 + $0x13c] sm:$0xf]
    %v123 = vld [vmem:[#allocation3 + $0x140] sm:$0xf]
    %v124 = vld [vmem:[#allocation3 + $0x144] sm:$0xf]
    %v125 = vld [vmem:[#allocation3 + $0x148] sm:$0xf]
    %v126 = vld [vmem:[#allocation3 + $0x14c] sm:$0xf]
    %v127 = vld [vmem:[#allocation3 + $0x150] sm:$0xf]
    %v128 = vld [vmem:[#allocation3 + $0x154] sm:$0xf]
    %v129 = vld [vmem:[#allocation3 + $0x158] sm:$0xf]
    %v130 = vld [vmem:[#allocation3 + $0x15c] sm:$0xf]
    %v131 = vld [vmem:[#allocation3 + $0x160] sm:$0xf]
    %v132 = vld [vmem:[#allocation3 + $0x164] sm:$0xf]
    %v133 = vld [vmem:[#allocation3 + $0x168] sm:$0xf]
    %v134 = vld [vmem:[#allocation3 + $0x16c] sm:$0xf]
    %v135 = vld [vmem:[#allocation3 + $0x170] sm:$0xf]
    %v136 = vld [vmem:[#allocation3 + $0x174] sm:$0xf]
    %v137 = vld [vmem:[#allocation3 + $0x178] sm:$0xf]
    %v138 = vld [vmem:[#allocation3 + $0x17c] sm:$0xf]
    %v139 = vld [vmem:[#allocation3 + $0x180] sm:$0xf]
    %v140 = vld [vmem:[#allocation3 + $0x184] sm:$0xf]
    %v141 = vld [vmem:[#allocation3 + $0x188] sm:$0xf]
    %v142 = vld [vmem:[#allocation3 + $0x18c] sm:$0xf]
    %v143 = vld [vmem:[#allocation3 + $0x190] sm:$0xf]
    %v144 = vld [vmem:[#allocation3 + $0x194] sm:$0xf]
    %v145 = vld [vmem:[#allocation3 + $0x198] sm:$0xf]
    %v146 = vld [vmem:[#allocation3 + $0x19c] sm:$0xf]
    %v147 = vld [vmem:[#allocation3 + $0x1a0] sm:$0xf]
    %v148 = vld [vmem:[#allocation3 + $0x1a4] sm:$0xf]
    %v149 = vld [vmem:[#allocation3 + $0x1a8] sm:$0xf]
    %v150 = vld [vmem:[#allocation3 + $0x1ac] sm:$0xf]
    %v151 = vld [vmem:[#allocation3 + $0x1b0] sm:$0xf]
    %v152 = vld [vmem:[#allocation3 + $0x1b4] sm:$0xf]
    %v153 = vld [vmem:[#allocation3 + $0x1b8] sm:$0xf]
    %v154 = vld [vmem:[#allocation3 + $0x1bc] sm:$0xf]
    %v155 = vld [vmem:[#allocation3 + $0x1c0] sm:$0xf]
    %v156 = vld [vmem:[#allocation3 + $0x1c4] sm:$0xf]
    %v157 = vld [vmem:[#allocation3 + $0x1c8] sm:$0xf]
    %v158 = vld [vmem:[#allocation3 + $0x1cc] sm:$0xf]
    %v159 = vld [vmem:[#allocation3 + $0x1d0] sm:$0xf]
    %v160 = vld [vmem:[#allocation3 + $0x1d4] sm:$0xf]
    %v161 = vld [vmem:[#allocation3 + $0x1d8] sm:$0xf]
    %v162 = vld [vmem:[#allocation3 + $0x1dc] sm:$0xf]
    %v163 = vld [vmem:[#allocation3 + $0x1e0] sm:$0xf]
    %v164 = vld [vmem:[#allocation3 + $0x1e4] sm:$0xf]
    %v165 = vld [vmem:[#allocation3 + $0x1e8] sm:$0xf]
    %v166 = vld [vmem:[#allocation3 + $0x1ec] sm:$0xf]
    %v167 = vld [vmem:[#allocation3 + $0x1f0] sm:$0xf]
    %v168 = vld [vmem:[#allocation3 + $0x1f4] sm:$0xf]
    %v169 = vld [vmem:[#allocation3 + $0x1f8] sm:$0xf]
    %v170 = vld [vmem:[#allocation3 + $0x1fc] sm:$0xf]
    %v171 = vunpack.c.l.bf16 %v43
    %v172 = vunpack.c.l.bf16 %v44
    %v173 = vunpack.c.l.bf16 %v45
    %v174 = vunpack.c.l.bf16 %v46
    %v175 = vunpack.c.l.bf16 %v47
    %v176 = vunpack.c.l.bf16 %v48
    %v177 = vunpack.c.l.bf16 %v49
    %v178 = vunpack.c.l.bf16 %v50
    %v179 = vunpack.c.l.bf16 %v51
    %v180 = vunpack.c.l.bf16 %v52
    %v181 = vunpack.c.l.bf16 %v53
    %v182 = vunpack.c.l.bf16 %v54
    %v183 = vunpack.c.l.bf16 %v55
    %v184 = vunpack.c.l.bf16 %v56
    %v185 = vunpack.c.l.bf16 %v57
    %v186 = vunpack.c.l.bf16 %v58
    %v187 = vunpack.c.l.bf16 %v59
    %v188 = vunpack.c.l.bf16 %v60
    %v189 = vunpack.c.l.bf16 %v61
    %v190 = vunpack.c.l.bf16 %v62
    %v191 = vunpack.c.l.bf16 %v63
    %v192 = vunpack.c.l.bf16 %v64
    %v193 = vunpack.c.l.bf16 %v65
    %v194 = vunpack.c.l.bf16 %v66
    %v195 = vunpack.c.l.bf16 %v67
    %v196 = vunpack.c.l.bf16 %v68
    %v197 = vunpack.c.l.bf16 %v69
    %v198 = vunpack.c.l.bf16 %v70
    %v199 = vunpack.c.l.bf16 %v71
    %v200 = vunpack.c.l.bf16 %v72
    %v201 = vunpack.c.l.bf16 %v73
    %v202 = vunpack.c.l.bf16 %v74
    %v203 = vunpack.c.l.bf16 %v75
    %v204 = vunpack.c.l.bf16 %v76
    %v205 = vunpack.c.l.bf16 %v77
    %v206 = vunpack.c.l.bf16 %v78
    %v207 = vunpack.c.l.bf16 %v79
    %v208 = vunpack.c.l.bf16 %v80
    %v209 = vunpack.c.l.bf16 %v81
    %v210 = vunpack.c.l.bf16 %v82
    %v211 = vunpack.c.l.bf16 %v83
    %v212 = vunpack.c.l.bf16 %v84
    %v213 = vunpack.c.l.bf16 %v85
    %v214 = vunpack.c.l.bf16 %v86
    %v215 = vunpack.c.l.bf16 %v87
    %v216 = vunpack.c.l.bf16 %v88
    %v217 = vunpack.c.l.bf16 %v89
    %v218 = vunpack.c.l.bf16 %v90
    %v219 = vunpack.c.l.bf16 %v91
    %v220 = vunpack.c.l.bf16 %v92
    %v221 = vunpack.c.l.bf16 %v93
    %v222 = vunpack.c.l.bf16 %v94
    %v223 = vunpack.c.l.bf16 %v95
    %v224 = vunpack.c.l.bf16 %v96
    %v225 = vunpack.c.l.bf16 %v97
    %v226 = vunpack.c.l.bf16 %v98
    %v227 = vunpack.c.l.bf16 %v99
    %v228 = vunpack.c.l.bf16 %v100
    %v229 = vunpack.c.l.bf16 %v101
    %v230 = vunpack.c.l.bf16 %v102
    %v231 = vunpack.c.l.bf16 %v103
    %v232 = vunpack.c.l.bf16 %v104
    %v233 = vunpack.c.l.bf16 %v105
    %v234 = vunpack.c.l.bf16 %v106
    %v235 = vunpack.c.l.bf16 %v107
    %v236 = vunpack.c.l.bf16 %v108
    %v237 = vunpack.c.l.bf16 %v109
    %v238 = vunpack.c.l.bf16 %v110
    %v239 = vunpack.c.l.bf16 %v111
    %v240 = vunpack.c.l.bf16 %v112
    %v241 = vunpack.c.l.bf16 %v113
    %v242 = vunpack.c.l.bf16 %v114
    %v243 = vunpack.c.l.bf16 %v115
    %v244 = vunpack.c.l.bf16 %v116
    %v245 = vunpack.c.l.bf16 %v117
    %v246 = vunpack.c.l.bf16 %v118
    %v247 = vunpack.c.l.bf16 %v119
    %v248 = vunpack.c.l.bf16 %v120
    %v249 = vunpack.c.l.bf16 %v121
    %v250 = vunpack.c.l.bf16 %v122
    %v251 = vunpack.c.l.bf16 %v123
    %v252 = vunpack.c.l.bf16 %v124
    %v253 = vunpack.c.l.bf16 %v125
    %v254 = vunpack.c.l.bf16 %v126
    %v255 = vunpack.c.l.bf16 %v127
    %v256 = vunpack.c.l.bf16 %v128
    %v257 = vunpack.c.l.bf16 %v129
    %v258 = vunpack.c.l.bf16 %v130
    %v259 = vunpack.c.l.bf16 %v131
    %v260 = vunpack.c.l.bf16 %v132
    %v261 = vunpack.c.l.bf16 %v133
    %v262 = vunpack.c.l.bf16 %v134
    %v263 = vunpack.c.l.bf16 %v135
    %v264 = vunpack.c.l.bf16 %v136
    %v265 = vunpack.c.l.bf16 %v137
    %v266 = vunpack.c.l.bf16 %v138
    %v267 = vunpack.c.l.bf16 %v139
    %v268 = vunpack.c.l.bf16 %v140
    %v269 = vunpack.c.l.bf16 %v141
    %v270 = vunpack.c.l.bf16 %v142
    %v271 = vunpack.c.l.bf16 %v143
    %v272 = vunpack.c.l.bf16 %v144
    %v273 = vunpack.c.l.bf16 %v145
    %v274 = vunpack.c.l.bf16 %v146
    %v275 = vunpack.c.l.bf16 %v147
    %v276 = vunpack.c.l.bf16 %v148
    %v277 = vunpack.c.l.bf16 %v149
    %v278 = vunpack.c.l.bf16 %v150
    %v279 = vunpack.c.l.bf16 %v151
    %v280 = vunpack.c.l.bf16 %v152
    %v281 = vunpack.c.l.bf16 %v153
    %v282 = vunpack.c.l.bf16 %v154
    %v283 = vunpack.c.l.bf16 %v155
    %v284 = vunpack.c.l.bf16 %v156
    %v285 = vunpack.c.l.bf16 %v157
    %v286 = vunpack.c.l.bf16 %v158
    %v287 = vunpack.c.l.bf16 %v159
    %v288 = vunpack.c.l.bf16 %v160
    %v289 = vunpack.c.l.bf16 %v161
    %v290 = vunpack.c.l.bf16 %v162
    %v291 = vunpack.c.l.bf16 %v163
    %v292 = vunpack.c.l.bf16 %v164
    %v293 = vunpack.c.l.bf16 %v165
    %v294 = vunpack.c.l.bf16 %v166
    %v295 = vunpack.c.l.bf16 %v167
    %v296 = vunpack.c.l.bf16 %v168
    %v297 = vunpack.c.l.bf16 %v169
    %v298 = vunpack.c.l.bf16 %v170
    %v299 = vld [vmem:[%s2] sm:$0xff]
    %v300 = vld [vmem:[%s2 + $0x8] sm:$0xff]
    %v303 = vcombine.high %v299, %v299
    %v305 = vunpack.c.l.s4 1983009808
    %v306 = vunpack.c.0.s8 %v305
    %v307 = vlaneseq
    %v308 = vshrl.u32 %v307, 7
    %v309 = vsub.s32 %v306, %v308
    %v310 = vrot.slane %v299, %v309
    %v312 = vunpack.c.l.s4 1983009808
    %v313 = vunpack.c.0.s8 %v312
    %v314 = vlaneseq
    %v315 = vshrl.u32 %v314, 7
    %v316 = vsub.s32 %v313, %v315
    %v317 = vrot.slane %v303, %v316
    %v318 = vcombine.high %v310, %v310
    %v319 = vcombine.high %v317, %v317
    %v320 = vcombine.high %v300, %v300
    %v322 = vunpack.c.l.s4 1983009808
    %v323 = vunpack.c.0.s8 %v322
    %v324 = vlaneseq
    %v325 = vshrl.u32 %v324, 7
    %v326 = vsub.s32 %v323, %v325
    %v327 = vrot.slane %v300, %v326
    %v329 = vunpack.c.l.s4 1983009808
    %v330 = vunpack.c.0.s8 %v329
    %v331 = vlaneseq
    %v332 = vshrl.u32 %v331, 7
    %v333 = vsub.s32 %v330, %v332
    %v334 = vrot.slane %v320, %v333
    %v335 = vcombine.high %v327, %v327
    %v336 = vcombine.high %v334, %v334
    %345 = vmatprep.subr.mxu0 0.0
    %346 = vmatpush1.msra.mxu0 %v171
    %347 = vmatprep.subr.mxu0 0.0
    %348 = vmatpush1.msra.mxu0 %v172
    %349 = vmatprep.subr.mxu0 0.0
    %350 = vmatpush1.msra.mxu0 %v173
    %351 = vmatprep.subr.mxu0 0.0
    %352 = vmatpush1.msra.mxu0 %v174
    %353 = vmatprep.subr.mxu0 0.0
    %354 = vmatpush1.msra.mxu0 %v175
    %355 = vmatprep.subr.mxu0 0.0
    %356 = vmatpush1.msra.mxu0 %v176
    %357 = vmatprep.subr.mxu0 0.0
    %358 = vmatpush1.msra.mxu0 %v177
    %359 = vmatprep.subr.mxu0 0.0
    %360 = vmatpush1.msra.mxu0 %v178
    %361 = vmatprep.subr.mxu0 0.0
    %362 = vmatpush1.msra.mxu0 %v179
    %363 = vmatprep.subr.mxu0 0.0
    %364 = vmatpush1.msra.mxu0 %v180
    %365 = vmatprep.subr.mxu0 0.0
    %366 = vmatpush1.msra.mxu0 %v181
    %367 = vmatprep.subr.mxu0 0.0
    %368 = vmatpush1.msra.mxu0 %v182
    %369 = vmatprep.subr.mxu0 0.0
    %370 = vmatpush1.msra.mxu0 %v183
    %371 = vmatprep.subr.mxu0 0.0
    %372 = vmatpush1.msra.mxu0 %v184
    %373 = vmatprep.subr.mxu0 0.0
    %374 = vmatpush1.msra.mxu0 %v185
    %375 = vmatprep.subr.mxu0 0.0
    %376 = vmatpush1.msra.mxu0 %v186
    %377 = vmatprep.subr.mxu0 0.0
    %378 = vmatpush1.msra.mxu0 %v187
    %379 = vmatprep.subr.mxu0 0.0
    %380 = vmatpush1.msra.mxu0 %v188
    %381 = vmatprep.subr.mxu0 0.0
    %382 = vmatpush1.msra.mxu0 %v189
    %383 = vmatprep.subr.mxu0 0.0
    %384 = vmatpush1.msra.mxu0 %v190
    %385 = vmatprep.subr.mxu0 0.0
    %386 = vmatpush1.msra.mxu0 %v191
    %387 = vmatprep.subr.mxu0 0.0
    %388 = vmatpush1.msra.mxu0 %v192
    %389 = vmatprep.subr.mxu0 0.0
    %390 = vmatpush1.msra.mxu0 %v193
    %391 = vmatprep.subr.mxu0 0.0
    %392 = vmatpush1.msra.mxu0 %v194
    %393 = vmatprep.subr.mxu0 0.0
    %394 = vmatpush1.msra.mxu0 %v195
    %395 = vmatprep.subr.mxu0 0.0
    %396 = vmatpush1.msra.mxu0 %v196
    %397 = vmatprep.subr.mxu0 0.0
    %398 = vmatpush1.msra.mxu0 %v197
    %399 = vmatprep.subr.mxu0 0.0
    %400 = vmatpush1.msra.mxu0 %v198
    %401 = vmatprep.subr.mxu0 0.0
    %402 = vmatpush1.msra.mxu0 %v199
    %403 = vmatprep.subr.mxu0 0.0
    %404 = vmatpush1.msra.mxu0 %v200
    %405 = vmatprep.subr.mxu0 0.0
    %406 = vmatpush1.msra.mxu0 %v201
    %407 = vmatprep.subr.mxu0 0.0
    %408 = vmatpush1.msra.mxu0 %v202
    %409 = vmatprep.mubr.f32.mxu0 %v318
    %410 = vmatmul.mubr.f32.gmra.mrb[0].mxu0 %v310
    %v411 = vpop.f32.mrb[0].mxu0
    %v412 = vadd.f32 0.0, %v411
    %v413 = vpop.f32.mrb[0].mxu0
    %414 = vdwg.mxu0
    %415 = vmatprep.subr.mxu0 0.0
    %416 = vmatpush1.msra.mxu0 %v203
    %417 = vmatprep.subr.mxu0 0.0
    %418 = vmatpush1.msra.mxu0 %v204
    %419 = vmatprep.subr.mxu0 0.0
    %420 = vmatpush1.msra.mxu0 %v205
    %421 = vmatprep.subr.mxu0 0.0
    %422 = vmatpush1.msra.mxu0 %v206
    %423 = vmatprep.subr.mxu0 0.0
    %424 = vmatpush1.msra.mxu0 %v207
    %425 = vmatprep.subr.mxu0 0.0
    %426 = vmatpush1.msra.mxu0 %v208
    %427 = vmatprep.subr.mxu0 0.0
    %428 = vmatpush1.msra.mxu0 %v209
    %429 = vmatprep.subr.mxu0 0.0
    %430 = vmatpush1.msra.mxu0 %v210
    %431 = vmatprep.subr.mxu0 0.0
    %432 = vmatpush1.msra.mxu0 %v211
    %433 = vmatprep.subr.mxu0 0.0
    %434 = vmatpush1.msra.mxu0 %v212
    %435 = vmatprep.subr.mxu0 0.0
    %436 = vmatpush1.msra.mxu0 %v213
    %437 = vmatprep.subr.mxu0 0.0
    %438 = vmatpush1.msra.mxu0 %v214
    %439 = vmatprep.subr.mxu0 0.0
    %440 = vmatpush1.msra.mxu0 %v215
    %441 = vmatprep.subr.mxu0 0.0
    %442 = vmatpush1.msra.mxu0 %v216
    %443 = vmatprep.subr.mxu0 0.0
    %444 = vmatpush1.msra.mxu0 %v217
    %445 = vmatprep.subr.mxu0 0.0
    %446 = vmatpush1.msra.mxu0 %v218
    %447 = vmatprep.subr.mxu0 0.0
    %448 = vmatpush1.msra.mxu0 %v219
    %449 = vmatprep.subr.mxu0 0.0
    %450 = vmatpush1.msra.mxu0 %v220
    %451 = vmatprep.subr.mxu0 0.0
    %452 = vmatpush1.msra.mxu0 %v221
    %453 = vmatprep.subr.mxu0 0.0
    %454 = vmatpush1.msra.mxu0 %v222
    %455 = vmatprep.subr.mxu0 0.0
    %456 = vmatpush1.msra.mxu0 %v223
    %457 = vmatprep.subr.mxu0 0.0
    %458 = vmatpush1.msra.mxu0 %v224
    %459 = vmatprep.subr.mxu0 0.0
    %460 = vmatpush1.msra.mxu0 %v225
    %461 = vmatprep.subr.mxu0 0.0
    %462 = vmatpush1.msra.mxu0 %v226
    %463 = vmatprep.subr.mxu0 0.0
    %464 = vmatpush1.msra.mxu0 %v227
    %465 = vmatprep.subr.mxu0 0.0
    %466 = vmatpush1.msra.mxu0 %v228
    %467 = vmatprep.subr.mxu0 0.0
    %468 = vmatpush1.msra.mxu0 %v229
    %469 = vmatprep.subr.mxu0 0.0
    %470 = vmatpush1.msra.mxu0 %v230
    %471 = vmatprep.subr.mxu0 0.0
    %472 = vmatpush1.msra.mxu0 %v231
    %473 = vmatprep.subr.mxu0 0.0
    %474 = vmatpush1.msra.mxu0 %v232
    %475 = vmatprep.subr.mxu0 0.0
    %476 = vmatpush1.msra.mxu0 %v233
    %477 = vmatprep.subr.mxu0 0.0
    %478 = vmatpush1.msra.mxu0 %v234
    %479 = vmatprep.mubr.f32.mxu0 %v319
    %480 = vmatmul.mubr.f32.gmra.mrb[0].mxu0 %v317
    %v481 = vpop.f32.mrb[0].mxu0
    %v482 = vadd.f32 %v412, %v481
    %v483 = vpop.f32.mrb[0].mxu0
    %484 = vdwg.mxu0
    %485 = vmatprep.subr.mxu0 0.0
    %486 = vmatpush1.msra.mxu0 %v235
    %487 = vmatprep.subr.mxu0 0.0
    %488 = vmatpush1.msra.mxu0 %v236
    %489 = vmatprep.subr.mxu0 0.0
    %490 = vmatpush1.msra.mxu0 %v237
    %491 = vmatprep.subr.mxu0 0.0
    %492 = vmatpush1.msra.mxu0 %v238
    %493 = vmatprep.subr.mxu0 0.0
    %494 = vmatpush1.msra.mxu0 %v239
    %495 = vmatprep.subr.mxu0 0.0
    %496 = vmatpush1.msra.mxu0 %v240
    %497 = vmatprep.subr.mxu0 0.0
    %498 = vmatpush1.msra.mxu0 %v241
    %499 = vmatprep.subr.mxu0 0.0
    %500 = vmatpush1.msra.mxu0 %v242
    %501 = vmatprep.subr.mxu0 0.0
    %502 = vmatpush1.msra.mxu0 %v243
    %503 = vmatprep.subr.mxu0 0.0
    %504 = vmatpush1.msra.mxu0 %v244
    %505 = vmatprep.subr.mxu0 0.0
    %506 = vmatpush1.msra.mxu0 %v245
    %507 = vmatprep.subr.mxu0 0.0
    %508 = vmatpush1.msra.mxu0 %v246
    %509 = vmatprep.subr.mxu0 0.0
    %510 = vmatpush1.msra.mxu0 %v247
    %511 = vmatprep.subr.mxu0 0.0
    %512 = vmatpush1.msra.mxu0 %v248
    %513 = vmatprep.subr.mxu0 0.0
    %514 = vmatpush1.msra.mxu0 %v249
    %515 = vmatprep.subr.mxu0 0.0
    %516 = vmatpush1.msra.mxu0 %v250
    %517 = vmatprep.subr.mxu0 0.0
    %518 = vmatpush1.msra.mxu0 %v251
    %519 = vmatprep.subr.mxu0 0.0
    %520 = vmatpush1.msra.mxu0 %v252
    %521 = vmatprep.subr.mxu0 0.0
    %522 = vmatpush1.msra.mxu0 %v253
    %523 = vmatprep.subr.mxu0 0.0
    %524 = vmatpush1.msra.mxu0 %v254
    %525 = vmatprep.subr.mxu0 0.0
    %526 = vmatpush1.msra.mxu0 %v255
    %527 = vmatprep.subr.mxu0 0.0
    %528 = vmatpush1.msra.mxu0 %v256
    %529 = vmatprep.subr.mxu0 0.0
    %530 = vmatpush1.msra.mxu0 %v257
    %531 = vmatprep.subr.mxu0 0.0
    %532 = vmatpush1.msra.mxu0 %v258
    %533 = vmatprep.subr.mxu0 0.0
    %534 = vmatpush1.msra.mxu0 %v259
    %535 = vmatprep.subr.mxu0 0.0
    %536 = vmatpush1.msra.mxu0 %v260
    %537 = vmatprep.subr.mxu0 0.0
    %538 = vmatpush1.msra.mxu0 %v261
    %539 = vmatprep.subr.mxu0 0.0
    %540 = vmatpush1.msra.mxu0 %v262
    %541 = vmatprep.subr.mxu0 0.0
    %542 = vmatpush1.msra.mxu0 %v263
    %543 = vmatprep.subr.mxu0 0.0
    %544 = vmatpush1.msra.mxu0 %v264
    %545 = vmatprep.subr.mxu0 0.0
    %546 = vmatpush1.msra.mxu0 %v265
    %547 = vmatprep.subr.mxu0 0.0
    %548 = vmatpush1.msra.mxu0 %v266
    %549 = vmatprep.mubr.f32.mxu0 %v335
    %550 = vmatmul.mubr.f32.gmra.mrb[0].mxu0 %v327
    %v551 = vpop.f32.mrb[0].mxu0
    %v552 = vadd.f32 %v482, %v551
    %v553 = vpop.f32.mrb[0].mxu0
    %554 = vdwg.mxu0
    %555 = vmatprep.subr.mxu0 0.0
    %556 = vmatpush1.msra.mxu0 %v267
    %557 = vmatprep.subr.mxu0 0.0
    %558 = vmatpush1.msra.mxu0 %v268
    %559 = vmatprep.subr.mxu0 0.0
    %560 = vmatpush1.msra.mxu0 %v269
    %561 = vmatprep.subr.mxu0 0.0
    %562 = vmatpush1.msra.mxu0 %v270
    %563 = vmatprep.subr.mxu0 0.0
    %564 = vmatpush1.msra.mxu0 %v271
    %565 = vmatprep.subr.mxu0 0.0
    %566 = vmatpush1.msra.mxu0 %v272
    %567 = vmatprep.subr.mxu0 0.0
    %568 = vmatpush1.msra.mxu0 %v273
    %569 = vmatprep.subr.mxu0 0.0
    %570 = vmatpush1.msra.mxu0 %v274
    %571 = vmatprep.subr.mxu0 0.0
    %572 = vmatpush1.msra.mxu0 %v275
    %573 = vmatprep.subr.mxu0 0.0
    %574 = vmatpush1.msra.mxu0 %v276
    %575 = vmatprep.subr.mxu0 0.0
    %576 = vmatpush1.msra.mxu0 %v277
    %577 = vmatprep.subr.mxu0 0.0
    %578 = vmatpush1.msra.mxu0 %v278
    %579 = vmatprep.subr.mxu0 0.0
    %580 = vmatpush1.msra.mxu0 %v279
    %581 = vmatprep.subr.mxu0 0.0
    %582 = vmatpush1.msra.mxu0 %v280
    %583 = vmatprep.subr.mxu0 0.0
    %584 = vmatpush1.msra.mxu0 %v281
    %585 = vmatprep.subr.mxu0 0.0
    %586 = vmatpush1.msra.mxu0 %v282
    %587 = vmatprep.subr.mxu0 0.0
    %588 = vmatpush1.msra.mxu0 %v283
    %589 = vmatprep.subr.mxu0 0.0
    %590 = vmatpush1.msra.mxu0 %v284
    %591 = vmatprep.subr.mxu0 0.0
    %592 = vmatpush1.msra.mxu0 %v285
    %593 = vmatprep.subr.mxu0 0.0
    %594 = vmatpush1.msra.mxu0 %v286
    %595 = vmatprep.subr.mxu0 0.0
    %596 = vmatpush1.msra.mxu0 %v287
    %597 = vmatprep.subr.mxu0 0.0
    %598 = vmatpush1.msra.mxu0 %v288
    %599 = vmatprep.subr.mxu0 0.0
    %600 = vmatpush1.msra.mxu0 %v289
    %601 = vmatprep.subr.mxu0 0.0
    %602 = vmatpush1.msra.mxu0 %v290
    %603 = vmatprep.subr.mxu0 0.0
    %604 = vmatpush1.msra.mxu0 %v291
    %605 = vmatprep.subr.mxu0 0.0
    %606 = vmatpush1.msra.mxu0 %v292
    %607 = vmatprep.subr.mxu0 0.0
    %608 = vmatpush1.msra.mxu0 %v293
    %609 = vmatprep.subr.mxu0 0.0
    %610 = vmatpush1.msra.mxu0 %v294
    %611 = vmatprep.subr.mxu0 0.0
    %612 = vmatpush1.msra.mxu0 %v295
    %613 = vmatprep.subr.mxu0 0.0
    %614 = vmatpush1.msra.mxu0 %v296
    %615 = vmatprep.subr.mxu0 0.0
    %616 = vmatpush1.msra.mxu0 %v297
    %617 = vmatprep.subr.mxu0 0.0
    %618 = vmatpush1.msra.mxu0 %v298
    %619 = vmatprep.mubr.f32.mxu0 %v336
    %620 = vmatmul.mubr.f32.gmra.mrb[0].mxu0 %v334
    %v621 = vpop.f32.mrb[0].mxu0
    %v622 = vadd.f32 %v552, %v621
    %v623 = vpop.f32.mrb[0].mxu0
    %624 = vdwg.mxu0
    %v627 = vunpack.c.l.s4 1966171168
    %v628 = vunpack.c.0.s8 %v627
    %v629 = vlaneseq
    %v630 = vshrl.u32 %v629, 7
    %v631 = vsub.s32 %v628, %v630
    %v632 = vrot.slane %v622, %v631
    %v633 = vcombine.high %v632, %v632
    %v635 = vunpack.c.l.s4 1966171168
    %v636 = vunpack.c.0.s8 %v635
    %v637 = vlaneseq
    %v638 = vshrl.u32 %v637, 7
    %v639 = vsub.s32 %v636, %v638
    %v640 = vrot.slane %v632, %v639
    %v642 = vunpack.c.l.s4 1966171168
    %v643 = vunpack.c.0.s8 %v642
    %v644 = vlaneseq
    %v645 = vshrl.u32 %v644, 7
    %v646 = vsub.s32 %v643, %v645
    %v647 = vrot.slane %v633, %v646
    %v648 = vld [vmem:[%s1] sm:$0xff]
    %v649 = vld [vmem:[%s1 + $0x8] sm:$0xff]
    %v650 = vlaneseq
    %v651 = vshrl.u32 %v650, 7
    %v652 = vsub.s32 0, %v651
    %v653 = vrot.slane %v640, %v652
    %v654 = vlaneseq
    %v655 = vshrl.u32 %v654, 7
    %v656 = vsub.s32 0, %v655
    %v657 = vrot.slane %v647, %v656
    %v660 = vadd.f32 %v653, %v648
    %v661 = vadd.f32 %v657, %v649
    %v662 = vtanh.pop %v660
    %v663 = vtanh.pop %v661
    %v664 = vld [vmem:[%s4] sm:$0xff]
    %v665 = vld [vmem:[%s4 + $0x8] sm:$0xff]
    %v666 = vld [vmem:[%s4 + $0x10] sm:$0xff]
    %v667 = vld [vmem:[%s4 + $0x18] sm:$0xff]
    %v668 = vld [vmem:[%s4 + $0x20] sm:$0xff]
    %v669 = vld [vmem:[%s4 + $0x28] sm:$0xff]
    %v670 = vld [vmem:[%s4 + $0x30] sm:$0xff]
    %v671 = vld [vmem:[%s4 + $0x38] sm:$0xff]
    %v672 = vld [vmem:[%s4 + $0x40] sm:$0xff]
    %v673 = vld [vmem:[%s4 + $0x48] sm:$0xff]
    %v674 = vld [vmem:[%s4 + $0x50] sm:$0xff]
    %v675 = vld [vmem:[%s4 + $0x58] sm:$0xff]
    %v676 = vld [vmem:[%s4 + $0x60] sm:$0xff]
    %v677 = vld [vmem:[%s4 + $0x68] sm:$0xff]
    %v678 = vld [vmem:[%s4 + $0x70] sm:$0xff]
    %v679 = vld [vmem:[%s4 + $0x78] sm:$0xff]
    %696 = vset.pattern.permute.xlu0 0
    %697 = vperm.xlu0 %696, %v664
    %v698 = vpop.permute.xlu0 %697
    %699 = vset.pattern.permute.xlu0 0
    %700 = vperm.xlu0 %699, %v665
    %v701 = vpop.permute.xlu0 %700
    %702 = vset.pattern.permute.xlu0 0
    %703 = vperm.xlu0 %702, %v666
    %v704 = vpop.permute.xlu0 %703
    %705 = vset.pattern.permute.xlu0 0
    %706 = vperm.xlu0 %705, %v667
    %v707 = vpop.permute.xlu0 %706
    %708 = vset.pattern.permute.xlu0 0
    %709 = vperm.xlu0 %708, %v668
    %v710 = vpop.permute.xlu0 %709
    %711 = vset.pattern.permute.xlu0 0
    %712 = vperm.xlu0 %711, %v669
    %v713 = vpop.permute.xlu0 %712
    %714 = vset.pattern.permute.xlu0 0
    %715 = vperm.xlu0 %714, %v670
    %v716 = vpop.permute.xlu0 %715
    %717 = vset.pattern.permute.xlu0 0
    %718 = vperm.xlu0 %717, %v671
    %v719 = vpop.permute.xlu0 %718
    %720 = vset.pattern.permute.xlu0 0
    %721 = vperm.xlu0 %720, %v672
    %v722 = vpop.permute.xlu0 %721
    %723 = vset.pattern.permute.xlu0 0
    %724 = vperm.xlu0 %723, %v673
    %v725 = vpop.permute.xlu0 %724
    %726 = vset.pattern.permute.xlu0 0
    %727 = vperm.xlu0 %726, %v674
    %v728 = vpop.permute.xlu0 %727
    %729 = vset.pattern.permute.xlu0 0
    %730 = vperm.xlu0 %729, %v675
    %v731 = vpop.permute.xlu0 %730
    %732 = vset.pattern.permute.xlu0 0
    %733 = vperm.xlu0 %732, %v676
    %v734 = vpop.permute.xlu0 %733
    %735 = vset.pattern.permute.xlu0 0
    %736 = vperm.xlu0 %735, %v677
    %v737 = vpop.permute.xlu0 %736
    %738 = vset.pattern.permute.xlu0 0
    %739 = vperm.xlu0 %738, %v678
    %v740 = vpop.permute.xlu0 %739
    %741 = vset.pattern.permute.xlu0 0
    %742 = vperm.xlu0 %741, %v679
    %v743 = vpop.permute.xlu0 %742
    %v744 = vlaneseq
    %v745 = vand.u32 %v744, 127
    %v746 = vlaneseq
    %v747 = vshrl.u32 %v746, 7
    %v748 = vsub.s32 %v745, %v747
    %v749 = vrot.slane %v698, %v748
    %v750 = vadd.s32 %v745, 4294967288
    %v751 = vlaneseq
    %v752 = vshrl.u32 %v751, 7
    %v753 = vsub.s32 %v750, %v752
    %v754 = vrot.slane %v701, %v753
    %vm755 = vcmask 130112
    %v756 = vsel %vm755, %v754, %v749
    %v757 = vadd.s32 %v745, 4294967280
    %v758 = vlaneseq
    %v759 = vshrl.u32 %v758, 7
    %v760 = vsub.s32 %v757, %v759
    %v761 = vrot.slane %v704, %v760
    %vm762 = vcmask 195712
    %v763 = vsel %vm762, %v761, %v756
    %v764 = vadd.s32 %v745, 4294967272
    %v765 = vlaneseq
    %v766 = vshrl.u32 %v765, 7
    %v767 = vsub.s32 %v764, %v766
    %v768 = vrot.slane %v707, %v767
    %vm769 = vcmask 261312
    %v770 = vsel %vm769, %v768, %v763
    %v771 = vadd.s32 %v745, 4294967264
    %v772 = vlaneseq
    %v773 = vshrl.u32 %v772, 7
    %v774 = vsub.s32 %v771, %v773
    %v775 = vrot.slane %v710, %v774
    %vm776 = vcmask 326912
    %v777 = vsel %vm776, %v775, %v770
    %v778 = vadd.s32 %v745, 4294967256
    %v779 = vlaneseq
    %v780 = vshrl.u32 %v779, 7
    %v781 = vsub.s32 %v778, %v780
    %v782 = vrot.slane %v713, %v781
    %vm783 = vcmask 392512
    %v784 = vsel %vm783, %v782, %v777
    %v785 = vadd.s32 %v745, 4294967248
    %v786 = vlaneseq
    %v787 = vshrl.u32 %v786, 7
    %v788 = vsub.s32 %v785, %v787
    %v789 = vrot.slane %v716, %v788
    %vm790 = vcmask 458112
    %v791 = vsel %vm790, %v789, %v784
    %v792 = vadd.s32 %v745, 4294967240
    %v793 = vlaneseq
    %v794 = vshrl.u32 %v793, 7
    %v795 = vsub.s32 %v792, %v794
    %v796 = vrot.slane %v719, %v795
    %vm797 = vcmask 523712
    %v798 = vsel %vm797, %v796, %v791
    %v799 = vadd.s32 %v745, 4294967232
    %v800 = vlaneseq
    %v801 = vshrl.u32 %v800, 7
    %v802 = vsub.s32 %v799, %v801
    %v803 = vrot.slane %v722, %v802
    %vm804 = vcmask 589312
    %v805 = vsel %vm804, %v803, %v798
    %v806 = vadd.s32 %v745, 4294967224
    %v807 = vlaneseq
    %v808 = vshrl.u32 %v807, 7
    %v809 = vsub.s32 %v806, %v808
    %v810 = vrot.slane %v725, %v809
    %vm811 = vcmask 654912
    %v812 = vsel %vm811, %v810, %v805
    %v813 = vadd.s32 %v745, 4294967216
    %v814 = vlaneseq
    %v815 = vshrl.u32 %v814, 7
    %v816 = vsub.s32 %v813, %v815
    %v817 = vrot.slane %v728, %v816
    %vm818 = vcmask 720512
    %v819 = vsel %vm818, %v817, %v812
    %v820 = vadd.s32 %v745, 4294967208
    %v821 = vlaneseq
    %v822 = vshrl.u32 %v821, 7
    %v823 = vsub.s32 %v820, %v822
    %v824 = vrot.slane %v731, %v823
    %vm825 = vcmask 786112
    %v826 = vsel %vm825, %v824, %v819
    %v827 = vadd.s32 %v745, 4294967200
    %v828 = vlaneseq
    %v829 = vshrl.u32 %v828, 7
    %v830 = vsub.s32 %v827, %v829
    %v831 = vrot.slane %v734, %v830
    %vm832 = vcmask 851712
    %v833 = vsel %vm832, %v831, %v826
    %v834 = vadd.s32 %v745, 4294967192
    %v835 = vlaneseq
    %v836 = vshrl.u32 %v835, 7
    %v837 = vsub.s32 %v834, %v836
    %v838 = vrot.slane %v737, %v837
    %vm839 = vcmask 917312
    %v840 = vsel %vm839, %v838, %v833
    %v841 = vadd.s32 %v745, 4294967184
    %v842 = vlaneseq
    %v843 = vshrl.u32 %v842, 7
    %v844 = vsub.s32 %v841, %v843
    %v845 = vrot.slane %v740, %v844
    %vm846 = vcmask 982912
    %v847 = vsel %vm846, %v845, %v840
    %v848 = vadd.s32 %v745, 4294967176
    %v849 = vlaneseq
    %v850 = vshrl.u32 %v849, 7
    %v851 = vsub.s32 %v848, %v850
    %v852 = vrot.slane %v743, %v851
    %vm853 = vcmask 1048512
    %v854 = vsel %vm853, %v852, %v847
    %vm855 = vcmask 1041409
    %vm856 = vcmask 1042434
    %v857 = vsel %vm856, %v854, %v854
    %vm858 = vcmask 1043459
    %v859 = vsel %vm858, %v854, %v857
    %vm860 = vcmask 1044484
    %v861 = vsel %vm860, %v854, %v859
    %vm862 = vcmask 1045509
    %v863 = vsel %vm862, %v854, %v861
    %vm864 = vcmask 1046534
    %v865 = vsel %vm864, %v854, %v863
    %vm866 = vcmask 1047559
    %v867 = vsel %vm866, %v854, %v865
    %v869 = vmul.f32 %v662, %v867
    %v870 = vmul.f32 %v663, %v867
    %871 = vadd.xlane.f32.xlu0 %v869
    %v872 = vpop.xlane.xlu0 %871
    %873 = vadd.xlane.f32.xlu0 %v870
    %v874 = vpop.xlane.xlu0 %873
    %v875 = vld [vmem:[#allocation2] sm:$0x1]
    %v877 = vlaneseq
    %v878 = vshrl.u32 %v877, 7
    %v879 = vsub.s32 0, %v878
    %v880 = vrot.slane %v875, %v879
    %881 = vset.pattern.permute.xlu0 0
    %882 = vperm.xlu0 %881, %v880
    %v883 = vpop.permute.xlu0 %882
    %v885 = vadd.f32 %v872, %v883
    %v886 = vadd.f32 %v874, %v883
    %v889 = vlaneseq
    %v890 = vshrl.u32 %v889, 7
    %v891 = vsub.s32 %v745, %v890
    %v892 = vrot.slane %v885, %v891
    %v893 = vlaneseq
    %v894 = vshrl.u32 %v893, 7
    %v895 = vsub.s32 %v745, %v894
    %v896 = vrot.slane %v886, %v895
    %v897 = vsel %vm855, %v896, %v892
    %vm899 = vcmask 58368
    %v900 = vsel %vm899, %v897, -inf
    %901 = vmax.xlane.f32.xlu0 %v900
    %v902 = vpop.xlane.xlu0 %901
    %v904 = vlaneseq
    %v905 = vshrl.u32 %v904, 7
    %v906 = vsub.s32 0, %v905
    %v907 = vrot.slane %v902, %v906
    %v908 = vlaneseq
    %v909 = vshrl.u32 %v908, 7
    %v910 = vsub.s32 1, %v909
    %v911 = vrot.slane %v902, %v910
    %v914 = vsub.f32 %v885, %v907
    %v915 = vsub.f32 %v886, %v911
    %v916 = vmul.f32 %v914, 1.442695
    %v917 = vpow.pop %v916
    %v918 = vmul.f32 %v915, 1.442695
    %v919 = vpow.pop %v918
    %922 = vset.pattern.permute.xlu0 0
    %923 = vperm.xlu0 %922, %v917
    %v924 = vpop.permute.xlu0 %923
    %925 = vset.pattern.permute.xlu0 0
    %926 = vperm.xlu0 %925, %v919
    %v927 = vpop.permute.xlu0 %926
    %v928 = vlaneseq
    %v929 = vshrl.u32 %v928, 7
    %v930 = vsub.s32 %v745, %v929
    %v931 = vrot.slane %v924, %v930
    %v932 = vlaneseq
    %v933 = vshrl.u32 %v932, 7
    %v934 = vsub.s32 %v745, %v933
    %v935 = vrot.slane %v927, %v934
    %v936 = vsel %vm855, %v935, %v931
    %v938 = vsel %vm899, %v936, 0.0
    %939 = vadd.xlane.f32.xlu0 %v938
    %v940 = vpop.xlane.xlu0 %939
    %v941 = vrcp.pop %v940
    %v943 = vlaneseq
    %v944 = vshrl.u32 %v943, 7
    %v945 = vsub.s32 0, %v944
    %v946 = vrot.slane %v941, %v945
    %v947 = vlaneseq
    %v948 = vshrl.u32 %v947, 7
    %v949 = vsub.s32 1, %v948
    %v950 = vrot.slane %v941, %v949
    %v953 = vmul.f32 %v917, %v946
    %v954 = vmul.f32 %v919, %v950
    %v955 = vld [vmem:[%s0] sm:$0xff]
    %v956 = vld [vmem:[%s0 + $0x8] sm:$0xff]
    %v957 = vld [vmem:[%s0 + $0x10] sm:$0xff]
    %v958 = vld [vmem:[%s0 + $0x18] sm:$0xff]
    %v959 = vld [vmem:[%s0 + $0x20] sm:$0xff]
    %v960 = vld [vmem:[%s0 + $0x28] sm:$0xff]
    %v961 = vld [vmem:[%s0 + $0x30] sm:$0xff]
    %v962 = vld [vmem:[%s0 + $0x38] sm:$0xff]
    %964 = vset.pattern.permute.xlu0 0
    %965 = vperm.xlu0 %964, %v953
    %v966 = vpop.permute.xlu0 %965
    %969 = vset.pattern.permute.xlu0 0
    %970 = vperm.xlu0 %969, %v954
    %v971 = vpop.permute.xlu0 %970
    %v973 = vmul.f32 %v955, %v966
    %v974 = vmul.f32 %v956, %v966
    %v975 = vmul.f32 %v957, %v966
    %v976 = vmul.f32 %v958, %v966
    %v977 = vmul.f32 %v959, %v971
    %v978 = vmul.f32 %v960, %v971
    %v979 = vmul.f32 %v961, %v971
    %v980 = vmul.f32 %v962, %v971
    %v981 = vrot.slane %v973, 4
    %v982 = vadd.f32 %v973, %v981
    %v983 = vrot.slane %v982, 2
    %v984 = vadd.f32 %v982, %v983
    %v985 = vrot.slane %v984, 1
    %v986 = vadd.f32 %v984, %v985
    %v987 = vrot.slane %v974, 4
    %v988 = vadd.f32 %v974, %v987
    %v989 = vrot.slane %v988, 2
    %v990 = vadd.f32 %v988, %v989
    %v991 = vrot.slane %v990, 1
    %v992 = vadd.f32 %v990, %v991
    %v993 = vrot.slane %v975, 4
    %v994 = vadd.f32 %v975, %v993
    %v995 = vrot.slane %v994, 2
    %v996 = vadd.f32 %v994, %v995
    %v997 = vrot.slane %v996, 1
    %v998 = vadd.f32 %v996, %v997
    %v999 = vrot.slane %v976, 4
    %v1000 = vadd.f32 %v976, %v999
    %v1001 = vrot.slane %v1000, 2
    %v1002 = vadd.f32 %v1000, %v1001
    %v1003 = vrot.slane %v1002, 1
    %v1004 = vadd.f32 %v1002, %v1003
    %v1005 = vrot.slane %v977, 4
    %v1006 = vadd.f32 %v977, %v1005
    %v1007 = vrot.slane %v1006, 2
    %v1008 = vadd.f32 %v1006, %v1007
    %v1009 = vrot.slane %v1008, 1
    %v1010 = vadd.f32 %v1008, %v1009
    %v1011 = vrot.slane %v978, 4
    %v1012 = vadd.f32 %v978, %v1011
    %v1013 = vrot.slane %v1012, 2
    %v1014 = vadd.f32 %v1012, %v1013
    %v1015 = vrot.slane %v1014, 1
    %v1016 = vadd.f32 %v1014, %v1015
    %v1017 = vrot.slane %v979, 4
    %v1018 = vadd.f32 %v979, %v1017
    %v1019 = vrot.slane %v1018, 2
    %v1020 = vadd.f32 %v1018, %v1019
    %v1021 = vrot.slane %v1020, 1
    %v1022 = vadd.f32 %v1020, %v1021
    %v1023 = vrot.slane %v980, 4
    %v1024 = vadd.f32 %v980, %v1023
    %v1025 = vrot.slane %v1024, 2
    %v1026 = vadd.f32 %v1024, %v1025
    %v1027 = vrot.slane %v1026, 1
    %v1028 = vadd.f32 %v1026, %v1027
    %v1037 = vcombine.low %v986, %v992
    %v1038 = vcombine.low %v998, %v1004
    %v1040 = vunpack.c.l.s4 1983009808
    %v1041 = vunpack.c.0.s8 %v1040
    %v1042 = vlaneseq
    %v1043 = vshrl.u32 %v1042, 7
    %v1044 = vsub.s32 %v1041, %v1043
    %v1045 = vrot.slane %v1037, %v1044
    %v1047 = vunpack.c.l.s4 1983009808
    %v1048 = vunpack.c.0.s8 %v1047
    %v1049 = vlaneseq
    %v1050 = vshrl.u32 %v1049, 7
    %v1051 = vsub.s32 %v1048, %v1050
    %v1052 = vrot.slane %v1038, %v1051
    %v1053 = vcombine.low %v1045, %v1052
    %v1054 = vcombine.low %v1010, %v1016
    %v1055 = vcombine.low %v1022, %v1028
    %v1057 = vunpack.c.l.s4 1983009808
    %v1058 = vunpack.c.0.s8 %v1057
    %v1059 = vlaneseq
    %v1060 = vshrl.u32 %v1059, 7
    %v1061 = vsub.s32 %v1058, %v1060
    %v1062 = vrot.slane %v1054, %v1061
    %v1064 = vunpack.c.l.s4 1983009808
    %v1065 = vunpack.c.0.s8 %v1064
    %v1066 = vlaneseq
    %v1067 = vshrl.u32 %v1066, 7
    %v1068 = vsub.s32 %v1065, %v1067
    %v1069 = vrot.slane %v1055, %v1068
    %v1070 = vcombine.low %v1062, %v1069
    %v1071 = vsel %vm860, %v1053, %v1053
    %v1072 = vsel %vm864, %v1053, %v1071
    %v1073 = vrot.slane %v1070, 7
    %v1074 = vsel %vm855, %v1073, %v1072
    %v1075 = vsel %vm858, %v1073, %v1074
    %v1076 = vsel %vm862, %v1073, %v1075
    %v1077 = vsel %vm866, %v1073, %v1076
    %1079 = vst [vmem:[#allocation6] sm:$0xff] %v1077
    %v1080 = vlaneseq
    %v1081 = vshrl.u32 %v1080, 7
    %v1082 = vsub.s32 %v745, %v1081
    %v1083 = vrot.slane %v966, %v1082
    %v1084 = vlaneseq
    %v1085 = vshrl.u32 %v1084, 7
    %v1086 = vsub.s32 %v745, %v1085
    %v1087 = vrot.slane %v971, %v1086
    %v1088 = vsel %vm855, %v1087, %v1083
    %1090 = vst.msk [vmem:[#allocation7] sm:$0x3] %vm899, %v1088
    // Predicated region
    $region30: #{bahdanau_attention.3} parent=1 // pred_check
      _
    $region31: #{bahdanau_attention.3} parent=1 // pred_check_branch
      %1092 = sbr.rel (0) target = $region33
    $region32: #{bahdanau_attention.3} parent=1 // pred_region
      %s1094 = ssub.s32 128, 128
      %1095 = vsyncadd [#allocation5], %s1094
      %s1097 = sshll.u32 [#allocation6], 4
      %s1098 = int_to_ptr.vmem [resolvable:$true] %s1097
      %1100 = dma.vmem_to_hbm [thread:$0]  %s1098, 128, %s6, [#allocation5]
    $region33: #{bahdanau_attention.3} parent=1 // pred_fallthru
      _
    // Predicated region
    $region34: #{bahdanau_attention.3} parent=1 // pred_check
      _
    $region35: #{bahdanau_attention.3} parent=1 // pred_check_branch
      %1102 = sbr.rel (0) target = $region37
    $region36: #{bahdanau_attention.3} parent=1 // pred_region
      %s1104 = ssub.s32 32, 32
      %1105 = vsyncadd [#allocation8], %s1104
      %s1107 = sshll.u32 [#allocation7], 4
      %s1108 = int_to_ptr.vmem [resolvable:$true] %s1107
      %1110 = dma.vmem_to_hbm [thread:$0]  %s1108, 32, %s7, [#allocation8]
    $region37: #{bahdanau_attention.3} parent=1 // pred_fallthru
      _
    // Predicated region
    $region38: #{bahdanau_attention.3} parent=1 // pred_check
      _
    $region39: #{bahdanau_attention.3} parent=1 // pred_check_branch
      %1112 = sbr.rel (0) target = $region41
    $region40: #{bahdanau_attention.3} parent=1 // pred_region
      %1113 = dma.done [#allocation5], 128
    $region41: #{bahdanau_attention.3} parent=1 // pred_fallthru
      _
    // Predicated region
    $region42: #{bahdanau_attention.3} parent=1 // pred_check
      _
    $region43: #{bahdanau_attention.3} parent=1 // pred_check_branch
      %1115 = sbr.rel (0) target = $region45
    $region44: #{bahdanau_attention.3} parent=1 // pred_region
      %1116 = dma.done [#allocation8], 32
    $region45: #{bahdanau_attention.3} parent=1 // pred_fallthru
      _
    %1117 = vsyncpa [#allocation4], 1
    %1118 = vsyncpa [#allocation5], 1
    %1119 = vsyncpa [#allocation8], 1

</llo_original>
